<compile_context>
chip_gen: v5e
topology: v5e:2x2
jax: 0.10.0
libtpu: 0.0.40
codegen_flags: <defaults>
</compile_context>

<pallas_src>
import functools

import jax
import jax.numpy as jnp
import numpy as np
from jax.experimental import pallas as pl
from jax.experimental.pallas import tpu as pltpu

EPS = 1e-5  # PyTorch GroupNorm default eps


# ---------------------------------------------------------------- kernel -----
def _make_kernel(block_b, H1, W1, H2, W2):
    """conv1(8x8/s4) + GroupNorm(E,E) + ReLU + conv2(3x3/s2), fused, per image."""
    W1e = (W1 + 1) // 2          # number of even columns (parity-split layout)

    def kernel(xcol_ref, w1_ref, b1_ref, g_ref, beta_ref, w2_ref, b2_ref,
               o_ref, y1_s, g_s):
        # xcol_ref : (Bb, P1, K1) bf16  conv1 im2col, columns in even/odd order
        # w1_ref   : (K1, Ep)     bf16
        # b1/g/beta/b2 : (1, Ep)  f32
        # w2_ref   : (9*Ep, Ep)   bf16  conv2 taps (t = kh*3+kw) stacked on K
        # o_ref    : (Bb, P2, Ep) bf16  final 'b (h w) c' tile (lane-dense)
        # y1_s     : (P1, Ep)   f32 VMEM scratch: GroupNorm+ReLU'd conv1 output
        # g_s      : (P2, 9*Ep) f32 VMEM scratch: conv2 im2col built from y1_s
        w1 = w1_ref[...]
        w2 = w2_ref[...]
        b1 = b1_ref[...]
        b2 = b2_ref[...]
        for i in range(block_b):
            # ---- conv1: one wide-K MXU dot (K = 8*8*Cin) --------------------
            y = jnp.dot(xcol_ref[i], w1,
                        preferred_element_type=jnp.float32) + b1      # (P1, Ep)

            # ---- GroupNorm(E, E): per-channel stats over spatial, f32 -------
            mean = jnp.mean(y, axis=0, keepdims=True)
            var = jnp.mean(y * y, axis=0, keepdims=True) - mean * mean
            var = jnp.maximum(var, 0.0)          # guard cancellation -> no NaN
            scale = g_ref[...] * jax.lax.rsqrt(var + EPS)
            shift = beta_ref[...] - mean * scale
            y1_s[...] = jnp.maximum(y * scale + shift, 0.0)            # ReLU

            # ---- conv2 (k=3, s=2): contiguous VMEM tap reads -----------------
            # conv1 columns are stored even-columns-first per row, so every
            # stride-2 column selection is a contiguous row range of y1_s.
            for qh in range(H2):
                taps = []
                for kh in range(3):
                    for kw in range(3):
                        col = (kw // 2) if kw % 2 == 0 else (W1e + kw // 2)
                        start = (2 * qh + kh) * W1 + col
                        taps.append(y1_s[pl.ds(start, W2), :])         # (W2, Ep)
                g_s[pl.ds(qh * W2, W2), :] = jnp.concatenate(taps, axis=1)

            # ---- single (P2, 9*Ep) @ (9*Ep, Ep) dot: tap sum on the MXU ------
            out = jnp.dot(g_s[...].astype(jnp.bfloat16), w2,
                          preferred_element_type=jnp.float32) + b2
            o_ref[i] = out.astype(o_ref.dtype)

    return kernel


# ------------------------------------------------------------- wrapper -------
@functools.partial(jax.jit, static_argnames=("block_b",))
def patch_embed2(x_nchw, w1, b1, gamma, beta, w2, b2, *, block_b=2):
    """Forward of PatchEmbed2 (use_norm=True).  Returns (B, H2*W2, E) f32."""
    E, Cin = w1.shape[0], w1.shape[1]
    B, _, H, W = x_nchw.shape
    H1, W1 = (H - 8) // 4 + 1, (W - 8) // 4 + 1
    H2, W2 = (H1 - 3) // 2 + 1, (W1 - 3) // 2 + 1
    P1, P2 = H1 * W1, H2 * W2
    K1 = 8 * 8 * Cin
    Ep = ((E + 127) // 128) * 128                # lane-dense channel padding

    # --- conv1 im2col (4x duplication, bf16) via non-overlapping 4x4 blocks ---
    Gh, Gw = H1 + 1, W1 + 1
    x_nhwc = jnp.transpose(x_nchw, (0, 2, 3, 1))[:, :4 * Gh, :4 * Gw, :]
    x4 = x_nhwc.reshape(B, Gh, 4, Gw, 4, Cin)
    x4 = jnp.transpose(x4, (0, 1, 3, 2, 4, 5))                  # (B,Gh,Gw,4,4,C)
    tl, tr = x4[:, :H1, :W1], x4[:, :H1, 1:W1 + 1]
    bl, br = x4[:, 1:H1 + 1, :W1], x4[:, 1:H1 + 1, 1:W1 + 1]
    top = jnp.concatenate([tl, tr], axis=4)                     # kh 0-3, kw 0-7
    bot = jnp.concatenate([bl, br], axis=4)                     # kh 4-7, kw 0-7
    patches = jnp.concatenate([top, bot], axis=3)               # (B,H1,W1,8,8,C)
    # even/odd column-parity split so conv2's stride-2 gather is contiguous
    patches = jnp.concatenate([patches[:, :, 0::2], patches[:, :, 1::2]], axis=2)
    xcol = patches.reshape(B, P1, K1).astype(jnp.bfloat16)

    # --- conv1 weight (E,Cin,8,8) -> (K1, Ep), (kh,kw,ci) row order -----------
    w1col = jnp.transpose(w1, (2, 3, 1, 0)).reshape(K1, E)
    w1col = jnp.pad(w1col, ((0, 0), (0, Ep - E))).astype(jnp.bfloat16)

    # --- conv2 weight (E,E,3,3) -> (9*Ep, Ep), taps t=kh*3+kw stacked on K ----
    w2t = jnp.transpose(w2, (2, 3, 1, 0))                       # (3,3,Ein,Eout)
    w2t = jnp.pad(w2t, ((0, 0), (0, 0), (0, Ep - E), (0, Ep - E)))
    w2cat = w2t.reshape(9 * Ep, Ep).astype(jnp.bfloat16)

    pad1 = lambda v: jnp.pad(v.astype(jnp.float32), (0, Ep - E)).reshape(1, Ep)
    b1p, gp, betap, b2p = pad1(b1), pad1(gamma), pad1(beta), pad1(b2)

    # --- batch blocking (amortize per-grid-step pipeline overhead) ------------
    Bb = max(1, min(block_b, B))
    Bp = ((B + Bb - 1) // Bb) * Bb
    if Bp != B:
        xcol = jnp.pad(xcol, ((0, Bp - B), (0, 0), (0, 0)))

    kernel = _make_kernel(Bb, H1, W1, H2, W2)

    out_p = pl.pallas_call(
        kernel,
        out_shape=jax.ShapeDtypeStruct((Bp, P2, Ep), jnp.bfloat16),
        grid=(Bp // Bb,),
        in_specs=[
            pl.BlockSpec((Bb, P1, K1), lambda b: (b, 0, 0)),
            pl.BlockSpec((K1, Ep), lambda b: (0, 0)),
            pl.BlockSpec((1, Ep), lambda b: (0, 0)),
            pl.BlockSpec((1, Ep), lambda b: (0, 0)),
            pl.BlockSpec((1, Ep), lambda b: (0, 0)),
            pl.BlockSpec((9 * Ep, Ep), lambda b: (0, 0)),
            pl.BlockSpec((1, Ep), lambda b: (0, 0)),
        ],
        out_specs=pl.BlockSpec((Bb, P2, Ep), lambda b: (b, 0, 0)),
        scratch_shapes=[pltpu.VMEM((P1, Ep), jnp.float32),
                        pltpu.VMEM((P2, 9 * Ep), jnp.float32)],
        compiler_params=pltpu.CompilerParams(
            dimension_semantics=("parallel",),
            vmem_limit_bytes=32 * 1024 * 1024),
    )(xcol, w1col, b1p, gp, betap, w2cat, b2p)

    # module contract: (B, H2*W2, E) float32 ('b (h w) c')
    return out_p[:B, :, :E].astype(jnp.float32)


# ------------------------------------------------------------- reference -----
def _reference(x, w1, b1, g, beta, w2, b2):
    dn = ("NCHW", "OIHW", "NCHW")
    y = jax.lax.conv_general_dilated(x, w1, (4, 4), "VALID", dimension_numbers=dn)
    y = y + b1[None, :, None, None]
    mean = y.mean(axis=(2, 3), keepdims=True)
    var = ((y - mean) ** 2).mean(axis=(2, 3), keepdims=True)
    y = (y - mean) * jax.lax.rsqrt(var + EPS)
    y = y * g[None, :, None, None] + beta[None, :, None, None]
    y = jnp.maximum(y, 0.0)
    y = jax.lax.conv_general_dilated(y, w2, (2, 2), "VALID", dimension_numbers=dn)
    y = y + b2[None, :, None, None]
    B, C, Ho, Wo = y.shape
    return jnp.transpose(y, (0, 2, 3, 1)).reshape(B, Ho * Wo, C)


# ------------------------------------------------------------------ main -----
if __name__ == "__main__":
    key = jax.random.PRNGKey(0)
    ks = jax.random.split(key, 7)

    B, Cin, H, W = 2, 3, 32, 32        # 32x32 -> conv1 7x7 -> conv2 3x3 = 9 patches
    E = 32                             # embed_dim

    x = jax.random.normal(ks[0], (B, Cin, H, W), jnp.float32)
    w1 = jax.random.normal(ks[1], (E, Cin, 8, 8), jnp.float32) * 0.05
    b1 = jax.random.normal(ks[2], (E,), jnp.float32) * 0.05
    gamma = 1.0 + 0.1 * jax.random.normal(ks[3], (E,), jnp.float32)
    beta = 0.1 * jax.random.normal(ks[4], (E,), jnp.float32)
    w2 = jax.random.normal(ks[5], (E, E, 3, 3), jnp.float32) * 0.05
    b2 = jax.random.normal(ks[6], (E,), jnp.float32) * 0.05

    out = jax.block_until_ready(patch_embed2(x, w1, b1, gamma, beta, w2, b2))
    ref = jax.block_until_ready(_reference(x, w1, b1, gamma, beta, w2, b2))

    # NOTE: bf16 matmuls / bf16 writeback vs f32 reference -> loose tolerance.
    np.testing.assert_allclose(np.asarray(out), np.asarray(ref),
                               rtol=2e-2, atol=2e-2)
    assert out.shape == (B, 9, E), out.shape

    print("KERNEL_OK")
</pallas_src>

<mosaic_0001>
module attributes {stable_mosaic.version = 11 : i64} {
  func.func @kernel(%arg0: i32, %arg1: memref<2x49x192xbf16, #tpu.memory_space<vmem>>, %arg2: memref<192x128xbf16, #tpu.memory_space<vmem>>, %arg3: memref<1x128xf32, #tpu.memory_space<vmem>>, %arg4: memref<1x128xf32, #tpu.memory_space<vmem>>, %arg5: memref<1x128xf32, #tpu.memory_space<vmem>>, %arg6: memref<1152x128xbf16, #tpu.memory_space<vmem>>, %arg7: memref<1x128xf32, #tpu.memory_space<vmem>>, %arg8: memref<2x9x128xbf16, #tpu.memory_space<vmem>>, %arg9: memref<49x128xf32, #tpu.memory_space<vmem>>, %arg10: memref<9x1152xf32, #tpu.memory_space<vmem>>) attributes {dimension_semantics = [#tpu.dimension_semantics<parallel>], iteration_bounds = array<i64: 1>, scalar_prefetch = 0 : i64, scratch_operands = 2 : i64, tpu.core_type = #tpu.core_type<tc>, window_params = [{transform_indices = @transform_0, window_bounds = array<i64: 2, 49, 192>}, {pipeline_mode = #tpu.pipeline_mode<synchronous>, transform_indices = @transform_1, window_bounds = array<i64: 192, 128>}, {pipeline_mode = #tpu.pipeline_mode<synchronous>, transform_indices = @transform_2, window_bounds = array<i64: 1, 128>}, {pipeline_mode = #tpu.pipeline_mode<synchronous>, transform_indices = @transform_3, window_bounds = array<i64: 1, 128>}, {pipeline_mode = #tpu.pipeline_mode<synchronous>, transform_indices = @transform_4, window_bounds = array<i64: 1, 128>}, {pipeline_mode = #tpu.pipeline_mode<synchronous>, transform_indices = @transform_5, window_bounds = array<i64: 1152, 128>}, {pipeline_mode = #tpu.pipeline_mode<synchronous>, transform_indices = @transform_6, window_bounds = array<i64: 1, 128>}, {transform_indices = @transform_7, window_bounds = array<i64: 2, 9, 128>}]} {
    %c0 = arith.constant 0 : index
    %c0_0 = arith.constant 0 : index
    %0 = vector.load %arg2[%c0, %c0_0] : memref<192x128xbf16, #tpu.memory_space<vmem>>, vector<192x128xbf16>
    %c0_1 = arith.constant 0 : index
    %c0_2 = arith.constant 0 : index
    %1 = vector.load %arg6[%c0_1, %c0_2] : memref<1152x128xbf16, #tpu.memory_space<vmem>>, vector<1152x128xbf16>
    %c0_3 = arith.constant 0 : index
    %c0_4 = arith.constant 0 : index
    %2 = vector.load %arg3[%c0_3, %c0_4] : memref<1x128xf32, #tpu.memory_space<vmem>>, vector<1x128xf32>
    %c0_5 = arith.constant 0 : index
    %c0_6 = arith.constant 0 : index
    %3 = vector.load %arg7[%c0_5, %c0_6] : memref<1x128xf32, #tpu.memory_space<vmem>>, vector<1x128xf32>
    %c0_7 = arith.constant 0 : index
    %c0_8 = arith.constant 0 : index
    %c0_9 = arith.constant 0 : index
    %4 = vector.load %arg1[%c0_7, %c0_8, %c0_9] : memref<2x49x192xbf16, #tpu.memory_space<vmem>>, vector<1x49x192xbf16>
    %5 = vector.shape_cast %4 : vector<1x49x192xbf16> to vector<49x192xbf16>
    %cst = arith.constant dense<0.000000e+00> : vector<49x128xf32>
    %6 = tpu.matmul %5, %0, %cst {dimension_numbers = #tpu.dot_dimension_numbers<[1], [0], [0], [1], [0, 0, 1, 1], [], []>} : vector<49x192xbf16>, vector<192x128xbf16>, vector<49x128xf32> -> vector<49x128xf32>
    %7 = vector.broadcast %2 : vector<1x128xf32> to vector<49x128xf32>
    %8 = arith.addf %6, %7 : vector<49x128xf32>
    %cst_10 = arith.constant dense<0.000000e+00> : vector<128xf32>
    %9 = vector.multi_reduction <add>, %8, %cst_10 [0] : vector<49x128xf32> to vector<128xf32>
    %10 = vector.shape_cast %9 : vector<128xf32> to vector<1x128xf32>
    %cst_11 = arith.constant 4.900000e+01 : f32
    %11 = vector.broadcast %cst_11 : f32 to vector<1x128xf32>
    %12 = arith.divf %10, %11 : vector<1x128xf32>
    %13 = arith.mulf %8, %8 : vector<49x128xf32>
    %cst_12 = arith.constant dense<0.000000e+00> : vector<128xf32>
    %14 = vector.multi_reduction <add>, %13, %cst_12 [0] : vector<49x128xf32> to vector<128xf32>
    %15 = vector.shape_cast %14 : vector<128xf32> to vector<1x128xf32>
    %cst_13 = arith.constant 4.900000e+01 : f32
    %16 = vector.broadcast %cst_13 : f32 to vector<1x128xf32>
    %17 = arith.divf %15, %16 : vector<1x128xf32>
    %18 = arith.mulf %12, %12 : vector<1x128xf32>
    %19 = arith.subf %17, %18 : vector<1x128xf32>
    %cst_14 = arith.constant 0.000000e+00 : f32
    %20 = vector.broadcast %cst_14 : f32 to vector<1x128xf32>
    %21 = arith.maximumf %19, %20 : vector<1x128xf32>
    %c0_15 = arith.constant 0 : index
    %c0_16 = arith.constant 0 : index
    %22 = vector.load %arg4[%c0_15, %c0_16] : memref<1x128xf32, #tpu.memory_space<vmem>>, vector<1x128xf32>
    %cst_17 = arith.constant 9.99999974E-6 : f32
    %23 = vector.broadcast %cst_17 : f32 to vector<1x128xf32>
    %24 = arith.addf %21, %23 : vector<1x128xf32>
    %25 = math.rsqrt %24 : vector<1x128xf32>
    %26 = arith.mulf %22, %25 : vector<1x128xf32>
    %c0_18 = arith.constant 0 : index
    %c0_19 = arith.constant 0 : index
    %27 = vector.load %arg5[%c0_18, %c0_19] : memref<1x128xf32, #tpu.memory_space<vmem>>, vector<1x128xf32>
    %28 = arith.mulf %12, %26 : vector<1x128xf32>
    %29 = arith.subf %27, %28 : vector<1x128xf32>
    %30 = vector.broadcast %26 : vector<1x128xf32> to vector<49x128xf32>
    %31 = arith.mulf %8, %30 : vector<49x128xf32>
    %32 = vector.broadcast %29 : vector<1x128xf32> to vector<49x128xf32>
    %33 = arith.addf %31, %32 : vector<49x128xf32>
    %cst_20 = arith.constant 0.000000e+00 : f32
    %34 = vector.broadcast %cst_20 : f32 to vector<49x128xf32>
    %35 = arith.maximumf %33, %34 : vector<49x128xf32>
    %c0_21 = arith.constant 0 : index
    %c0_22 = arith.constant 0 : index
    %36 = vector.load %arg9[%c0_21, %c0_22] : memref<49x128xf32, #tpu.memory_space<vmem>>, vector<49x128xf32>
    tpu.vector_store %arg9[%c0_21, %c0_22], %35 {strides = array<i32>} : memref<49x128xf32, #tpu.memory_space<vmem>>, vector<49x128xf32>,
    %c0_23 = arith.constant 0 : index
    %c0_24 = arith.constant 0 : index
    %37 = vector.load %arg9[%c0_23, %c0_24] : memref<49x128xf32, #tpu.memory_space<vmem>>, vector<3x128xf32>
    %c4 = arith.constant 4 : index
    %c0_25 = arith.constant 0 : index
    %38 = vector.load %arg9[%c4, %c0_25] : memref<49x128xf32, #tpu.memory_space<vmem>>, vector<3x128xf32>
    %c1 = arith.constant 1 : index
    %c0_26 = arith.constant 0 : index
    %39 = vector.load %arg9[%c1, %c0_26] : memref<49x128xf32, #tpu.memory_space<vmem>>, vector<3x128xf32>
    %c7 = arith.constant 7 : index
    %c0_27 = arith.constant 0 : index
    %40 = vector.load %arg9[%c7, %c0_27] : memref<49x128xf32, #tpu.memory_space<vmem>>, vector<3x128xf32>
    %c11 = arith.constant 11 : index
    %c0_28 = arith.constant 0 : index
    %41 = vector.load %arg9[%c11, %c0_28] : memref<49x128xf32, #tpu.memory_space<vmem>>, vector<3x128xf32>
    %c8 = arith.constant 8 : index
    %c0_29 = arith.constant 0 : index
    %42 = vector.load %arg9[%c8, %c0_29] : memref<49x128xf32, #tpu.memory_space<vmem>>, vector<3x128xf32>
    %c14 = arith.constant 14 : index
    %c0_30 = arith.constant 0 : index
    %43 = vector.load %arg9[%c14, %c0_30] : memref<49x128xf32, #tpu.memory_space<vmem>>, vector<3x128xf32>
    %c18 = arith.constant 18 : index
    %c0_31 = arith.constant 0 : index
    %44 = vector.load %arg9[%c18, %c0_31] : memref<49x128xf32, #tpu.memory_space<vmem>>, vector<3x128xf32>
    %c15 = arith.constant 15 : index
    %c0_32 = arith.constant 0 : index
    %45 = vector.load %arg9[%c15, %c0_32] : memref<49x128xf32, #tpu.memory_space<vmem>>, vector<3x128xf32>
    %46 = tpu.concatenate %37, %38, %39, %40, %41, %42, %43, %44, %45 in 1 : vector<3x128xf32>, vector<3x128xf32>, vector<3x128xf32>, vector<3x128xf32>, vector<3x128xf32>, vector<3x128xf32>, vector<3x128xf32>, vector<3x128xf32>, vector<3x128xf32> -> vector<3x1152xf32>
    %c0_33 = arith.constant 0 : index
    %c0_34 = arith.constant 0 : index
    %47 = vector.load %arg10[%c0_33, %c0_34] : memref<9x1152xf32, #tpu.memory_space<vmem>>, vector<3x1152xf32>
    tpu.vector_store %arg10[%c0_33, %c0_34], %46 {strides = array<i32>} : memref<9x1152xf32, #tpu.memory_space<vmem>>, vector<3x1152xf32>,
    %c14_35 = arith.constant 14 : index
    %c0_36 = arith.constant 0 : index
    %48 = vector.load %arg9[%c14_35, %c0_36] : memref<49x128xf32, #tpu.memory_space<vmem>>, vector<3x128xf32>
    %c18_37 = arith.constant 18 : index
    %c0_38 = arith.constant 0 : index
    %49 = vector.load %arg9[%c18_37, %c0_38] : memref<49x128xf32, #tpu.memory_space<vmem>>, vector<3x128xf32>
    %c15_39 = arith.constant 15 : index
    %c0_40 = arith.constant 0 : index
    %50 = vector.load %arg9[%c15_39, %c0_40] : memref<49x128xf32, #tpu.memory_space<vmem>>, vector<3x128xf32>
    %c21 = arith.constant 21 : index
    %c0_41 = arith.constant 0 : index
    %51 = vector.load %arg9[%c21, %c0_41] : memref<49x128xf32, #tpu.memory_space<vmem>>, vector<3x128xf32>
    %c25 = arith.constant 25 : index
    %c0_42 = arith.constant 0 : index
    %52 = vector.load %arg9[%c25, %c0_42] : memref<49x128xf32, #tpu.memory_space<vmem>>, vector<3x128xf32>
    %c22 = arith.constant 22 : index
    %c0_43 = arith.constant 0 : index
    %53 = vector.load %arg9[%c22, %c0_43] : memref<49x128xf32, #tpu.memory_space<vmem>>, vector<3x128xf32>
    %c28 = arith.constant 28 : index
    %c0_44 = arith.constant 0 : index
    %54 = vector.load %arg9[%c28, %c0_44] : memref<49x128xf32, #tpu.memory_space<vmem>>, vector<3x128xf32>
    %c32 = arith.constant 32 : index
    %c0_45 = arith.constant 0 : index
    %55 = vector.load %arg9[%c32, %c0_45] : memref<49x128xf32, #tpu.memory_space<vmem>>, vector<3x128xf32>
    %c29 = arith.constant 29 : index
    %c0_46 = arith.constant 0 : index
    %56 = vector.load %arg9[%c29, %c0_46] : memref<49x128xf32, #tpu.memory_space<vmem>>, vector<3x128xf32>
    %57 = tpu.concatenate %48, %49, %50, %51, %52, %53, %54, %55, %56 in 1 : vector<3x128xf32>, vector<3x128xf32>, vector<3x128xf32>, vector<3x128xf32>, vector<3x128xf32>, vector<3x128xf32>, vector<3x128xf32>, vector<3x128xf32>, vector<3x128xf32> -> vector<3x1152xf32>
    %c3 = arith.constant 3 : index
    %c0_47 = arith.constant 0 : index
    %58 = vector.load %arg10[%c3, %c0_47] : memref<9x1152xf32, #tpu.memory_space<vmem>>, vector<3x1152xf32>
    tpu.vector_store %arg10[%c3, %c0_47], %57 {strides = array<i32>} : memref<9x1152xf32, #tpu.memory_space<vmem>>, vector<3x1152xf32>,
    %c28_48 = arith.constant 28 : index
    %c0_49 = arith.constant 0 : index
    %59 = vector.load %arg9[%c28_48, %c0_49] : memref<49x128xf32, #tpu.memory_space<vmem>>, vector<3x128xf32>
    %c32_50 = arith.constant 32 : index
    %c0_51 = arith.constant 0 : index
    %60 = vector.load %arg9[%c32_50, %c0_51] : memref<49x128xf32, #tpu.memory_space<vmem>>, vector<3x128xf32>
    %c29_52 = arith.constant 29 : index
    %c0_53 = arith.constant 0 : index
    %61 = vector.load %arg9[%c29_52, %c0_53] : memref<49x128xf32, #tpu.memory_space<vmem>>, vector<3x128xf32>
    %c35 = arith.constant 35 : index
    %c0_54 = arith.constant 0 : index
    %62 = vector.load %arg9[%c35, %c0_54] : memref<49x128xf32, #tpu.memory_space<vmem>>, vector<3x128xf32>
    %c39 = arith.constant 39 : index
    %c0_55 = arith.constant 0 : index
    %63 = vector.load %arg9[%c39, %c0_55] : memref<49x128xf32, #tpu.memory_space<vmem>>, vector<3x128xf32>
    %c36 = arith.constant 36 : index
    %c0_56 = arith.constant 0 : index
    %64 = vector.load %arg9[%c36, %c0_56] : memref<49x128xf32, #tpu.memory_space<vmem>>, vector<3x128xf32>
    %c42 = arith.constant 42 : index
    %c0_57 = arith.constant 0 : index
    %65 = vector.load %arg9[%c42, %c0_57] : memref<49x128xf32, #tpu.memory_space<vmem>>, vector<3x128xf32>
    %c46 = arith.constant 46 : index
    %c0_58 = arith.constant 0 : index
    %66 = vector.load %arg9[%c46, %c0_58] : memref<49x128xf32, #tpu.memory_space<vmem>>, vector<3x128xf32>
    %c43 = arith.constant 43 : index
    %c0_59 = arith.constant 0 : index
    %67 = vector.load %arg9[%c43, %c0_59] : memref<49x128xf32, #tpu.memory_space<vmem>>, vector<3x128xf32>
    %68 = tpu.concatenate %59, %60, %61, %62, %63, %64, %65, %66, %67 in 1 : vector<3x128xf32>, vector<3x128xf32>, vector<3x128xf32>, vector<3x128xf32>, vector<3x128xf32>, vector<3x128xf32>, vector<3x128xf32>, vector<3x128xf32>, vector<3x128xf32> -> vector<3x1152xf32>
    %c6 = arith.constant 6 : index
    %c0_60 = arith.constant 0 : index
    %69 = vector.load %arg10[%c6, %c0_60] : memref<9x1152xf32, #tpu.memory_space<vmem>>, vector<3x1152xf32>
    tpu.vector_store %arg10[%c6, %c0_60], %68 {strides = array<i32>} : memref<9x1152xf32, #tpu.memory_space<vmem>>, vector<3x1152xf32>,
    %c0_61 = arith.constant 0 : index
    %c0_62 = arith.constant 0 : index
    %70 = vector.load %arg10[%c0_61, %c0_62] : memref<9x1152xf32, #tpu.memory_space<vmem>>, vector<9x1152xf32>
    %71 = arith.truncf %70 : vector<9x1152xf32> to vector<9x1152xbf16>
    %cst_63 = arith.constant dense<0.000000e+00> : vector<9x128xf32>
    %72 = tpu.matmul %71, %1, %cst_63 {dimension_numbers = #tpu.dot_dimension_numbers<[1], [0], [0], [1], [0, 0, 1, 1], [], []>} : vector<9x1152xbf16>, vector<1152x128xbf16>, vector<9x128xf32> -> vector<9x128xf32>
    %73 = vector.broadcast %3 : vector<1x128xf32> to vector<9x128xf32>
    %74 = arith.addf %72, %73 : vector<9x128xf32>
    %75 = arith.truncf %74 : vector<9x128xf32> to vector<9x128xbf16>
    %c0_64 = arith.constant 0 : index
    %c0_65 = arith.constant 0 : index
    %c0_66 = arith.constant 0 : index
    %76 = vector.load %arg8[%c0_64, %c0_65, %c0_66] : memref<2x9x128xbf16, #tpu.memory_space<vmem>>, vector<1x9x128xbf16>
    %77 = vector.shape_cast %76 : vector<1x9x128xbf16> to vector<9x128xbf16>
    %78 = vector.shape_cast %75 : vector<9x128xbf16> to vector<1x9x128xbf16>
    tpu.vector_store %arg8[%c0_64, %c0_65, %c0_66], %78 {strides = array<i32>} : memref<2x9x128xbf16, #tpu.memory_space<vmem>>, vector<1x9x128xbf16>,
    %c1_67 = arith.constant 1 : index
    %c0_68 = arith.constant 0 : index
    %c0_69 = arith.constant 0 : index
    %79 = vector.load %arg1[%c1_67, %c0_68, %c0_69] : memref<2x49x192xbf16, #tpu.memory_space<vmem>>, vector<1x49x192xbf16>
    %80 = vector.shape_cast %79 : vector<1x49x192xbf16> to vector<49x192xbf16>
    %cst_70 = arith.constant dense<0.000000e+00> : vector<49x128xf32>
    %81 = tpu.matmul %80, %0, %cst_70 {dimension_numbers = #tpu.dot_dimension_numbers<[1], [0], [0], [1], [0, 0, 1, 1], [], []>} : vector<49x192xbf16>, vector<192x128xbf16>, vector<49x128xf32> -> vector<49x128xf32>
    %82 = vector.broadcast %2 : vector<1x128xf32> to vector<49x128xf32>
    %83 = arith.addf %81, %82 : vector<49x128xf32>
    %cst_71 = arith.constant dense<0.000000e+00> : vector<128xf32>
    %84 = vector.multi_reduction <add>, %83, %cst_71 [0] : vector<49x128xf32> to vector<128xf32>
    %85 = vector.shape_cast %84 : vector<128xf32> to vector<1x128xf32>
    %cst_72 = arith.constant 4.900000e+01 : f32
    %86 = vector.broadcast %cst_72 : f32 to vector<1x128xf32>
    %87 = arith.divf %85, %86 : vector<1x128xf32>
    %88 = arith.mulf %83, %83 : vector<49x128xf32>
    %cst_73 = arith.constant dense<0.000000e+00> : vector<128xf32>
    %89 = vector.multi_reduction <add>, %88, %cst_73 [0] : vector<49x128xf32> to vector<128xf32>
    %90 = vector.shape_cast %89 : vector<128xf32> to vector<1x128xf32>
    %cst_74 = arith.constant 4.900000e+01 : f32
    %91 = vector.broadcast %cst_74 : f32 to vector<1x128xf32>
    %92 = arith.divf %90, %91 : vector<1x128xf32>
    %93 = arith.mulf %87, %87 : vector<1x128xf32>
    %94 = arith.subf %92, %93 : vector<1x128xf32>
    %cst_75 = arith.constant 0.000000e+00 : f32
    %95 = vector.broadcast %cst_75 : f32 to vector<1x128xf32>
    %96 = arith.maximumf %94, %95 : vector<1x128xf32>
    %c0_76 = arith.constant 0 : index
    %c0_77 = arith.constant 0 : index
    %97 = vector.load %arg4[%c0_76, %c0_77] : memref<1x128xf32, #tpu.memory_space<vmem>>, vector<1x128xf32>
    %cst_78 = arith.constant 9.99999974E-6 : f32
    %98 = vector.broadcast %cst_78 : f32 to vector<1x128xf32>
    %99 = arith.addf %96, %98 : vector<1x128xf32>
    %100 = math.rsqrt %99 : vector<1x128xf32>
    %101 = arith.mulf %97, %100 : vector<1x128xf32>
    %c0_79 = arith.constant 0 : index
    %c0_80 = arith.constant 0 : index
    %102 = vector.load %arg5[%c0_79, %c0_80] : memref<1x128xf32, #tpu.memory_space<vmem>>, vector<1x128xf32>
    %103 = arith.mulf %87, %101 : vector<1x128xf32>
    %104 = arith.subf %102, %103 : vector<1x128xf32>
    %105 = vector.broadcast %101 : vector<1x128xf32> to vector<49x128xf32>
    %106 = arith.mulf %83, %105 : vector<49x128xf32>
    %107 = vector.broadcast %104 : vector<1x128xf32> to vector<49x128xf32>
    %108 = arith.addf %106, %107 : vector<49x128xf32>
    %cst_81 = arith.constant 0.000000e+00 : f32
    %109 = vector.broadcast %cst_81 : f32 to vector<49x128xf32>
    %110 = arith.maximumf %108, %109 : vector<49x128xf32>
    %c0_82 = arith.constant 0 : index
    %c0_83 = arith.constant 0 : index
    %111 = vector.load %arg9[%c0_82, %c0_83] : memref<49x128xf32, #tpu.memory_space<vmem>>, vector<49x128xf32>
    tpu.vector_store %arg9[%c0_82, %c0_83], %110 {strides = array<i32>} : memref<49x128xf32, #tpu.memory_space<vmem>>, vector<49x128xf32>,
    %c0_84 = arith.constant 0 : index
    %c0_85 = arith.constant 0 : index
    %112 = vector.load %arg9[%c0_84, %c0_85] : memref<49x128xf32, #tpu.memory_space<vmem>>, vector<3x128xf32>
    %c4_86 = arith.constant 4 : index
    %c0_87 = arith.constant 0 : index
    %113 = vector.load %arg9[%c4_86, %c0_87] : memref<49x128xf32, #tpu.memory_space<vmem>>, vector<3x128xf32>
    %c1_88 = arith.constant 1 : index
    %c0_89 = arith.constant 0 : index
    %114 = vector.load %arg9[%c1_88, %c0_89] : memref<49x128xf32, #tpu.memory_space<vmem>>, vector<3x128xf32>
    %c7_90 = arith.constant 7 : index
    %c0_91 = arith.constant 0 : index
    %115 = vector.load %arg9[%c7_90, %c0_91] : memref<49x128xf32, #tpu.memory_space<vmem>>, vector<3x128xf32>
    %c11_92 = arith.constant 11 : index
    %c0_93 = arith.constant 0 : index
    %116 = vector.load %arg9[%c11_92, %c0_93] : memref<49x128xf32, #tpu.memory_space<vmem>>, vector<3x128xf32>
    %c8_94 = arith.constant 8 : index
    %c0_95 = arith.constant 0 : index
    %117 = vector.load %arg9[%c8_94, %c0_95] : memref<49x128xf32, #tpu.memory_space<vmem>>, vector<3x128xf32>
    %c14_96 = arith.constant 14 : index
    %c0_97 = arith.constant 0 : index
    %118 = vector.load %arg9[%c14_96, %c0_97] : memref<49x128xf32, #tpu.memory_space<vmem>>, vector<3x128xf32>
    %c18_98 = arith.constant 18 : index
    %c0_99 = arith.constant 0 : index
    %119 = vector.load %arg9[%c18_98, %c0_99] : memref<49x128xf32, #tpu.memory_space<vmem>>, vector<3x128xf32>
    %c15_100 = arith.constant 15 : index
    %c0_101 = arith.constant 0 : index
    %120 = vector.load %arg9[%c15_100, %c0_101] : memref<49x128xf32, #tpu.memory_space<vmem>>, vector<3x128xf32>
    %121 = tpu.concatenate %112, %113, %114, %115, %116, %117, %118, %119, %120 in 1 : vector<3x128xf32>, vector<3x128xf32>, vector<3x128xf32>, vector<3x128xf32>, vector<3x128xf32>, vector<3x128xf32>, vector<3x128xf32>, vector<3x128xf32>, vector<3x128xf32> -> vector<3x1152xf32>
    %c0_102 = arith.constant 0 : index
    %c0_103 = arith.constant 0 : index
    %122 = vector.load %arg10[%c0_102, %c0_103] : memref<9x1152xf32, #tpu.memory_space<vmem>>, vector<3x1152xf32>
    tpu.vector_store %arg10[%c0_102, %c0_103], %121 {strides = array<i32>} : memref<9x1152xf32, #tpu.memory_space<vmem>>, vector<3x1152xf32>,
    %c14_104 = arith.constant 14 : index
    %c0_105 = arith.constant 0 : index
    %123 = vector.load %arg9[%c14_104, %c0_105] : memref<49x128xf32, #tpu.memory_space<vmem>>, vector<3x128xf32>
    %c18_106 = arith.constant 18 : index
    %c0_107 = arith.constant 0 : index
    %124 = vector.load %arg9[%c18_106, %c0_107] : memref<49x128xf32, #tpu.memory_space<vmem>>, vector<3x128xf32>
    %c15_108 = arith.constant 15 : index
    %c0_109 = arith.constant 0 : index
    %125 = vector.load %arg9[%c15_108, %c0_109] : memref<49x128xf32, #tpu.memory_space<vmem>>, vector<3x128xf32>
    %c21_110 = arith.constant 21 : index
    %c0_111 = arith.constant 0 : index
    %126 = vector.load %arg9[%c21_110, %c0_111] : memref<49x128xf32, #tpu.memory_space<vmem>>, vector<3x128xf32>
    %c25_112 = arith.constant 25 : index
    %c0_113 = arith.constant 0 : index
    %127 = vector.load %arg9[%c25_112, %c0_113] : memref<49x128xf32, #tpu.memory_space<vmem>>, vector<3x128xf32>
    %c22_114 = arith.constant 22 : index
    %c0_115 = arith.constant 0 : index
    %128 = vector.load %arg9[%c22_114, %c0_115] : memref<49x128xf32, #tpu.memory_space<vmem>>, vector<3x128xf32>
    %c28_116 = arith.constant 28 : index
    %c0_117 = arith.constant 0 : index
    %129 = vector.load %arg9[%c28_116, %c0_117] : memref<49x128xf32, #tpu.memory_space<vmem>>, vector<3x128xf32>
    %c32_118 = arith.constant 32 : index
    %c0_119 = arith.constant 0 : index
    %130 = vector.load %arg9[%c32_118, %c0_119] : memref<49x128xf32, #tpu.memory_space<vmem>>, vector<3x128xf32>
    %c29_120 = arith.constant 29 : index
    %c0_121 = arith.constant 0 : index
    %131 = vector.load %arg9[%c29_120, %c0_121] : memref<49x128xf32, #tpu.memory_space<vmem>>, vector<3x128xf32>
    %132 = tpu.concatenate %123, %124, %125, %126, %127, %128, %129, %130, %131 in 1 : vector<3x128xf32>, vector<3x128xf32>, vector<3x128xf32>, vector<3x128xf32>, vector<3x128xf32>, vector<3x128xf32>, vector<3x128xf32>, vector<3x128xf32>, vector<3x128xf32> -> vector<3x1152xf32>
    %c3_122 = arith.constant 3 : index
    %c0_123 = arith.constant 0 : index
    %133 = vector.load %arg10[%c3_122, %c0_123] : memref<9x1152xf32, #tpu.memory_space<vmem>>, vector<3x1152xf32>
    tpu.vector_store %arg10[%c3_122, %c0_123], %132 {strides = array<i32>} : memref<9x1152xf32, #tpu.memory_space<vmem>>, vector<3x1152xf32>,
    %c28_124 = arith.constant 28 : index
    %c0_125 = arith.constant 0 : index
    %134 = vector.load %arg9[%c28_124, %c0_125] : memref<49x128xf32, #tpu.memory_space<vmem>>, vector<3x128xf32>
    %c32_126 = arith.constant 32 : index
    %c0_127 = arith.constant 0 : index
    %135 = vector.load %arg9[%c32_126, %c0_127] : memref<49x128xf32, #tpu.memory_space<vmem>>, vector<3x128xf32>
    %c29_128 = arith.constant 29 : index
    %c0_129 = arith.constant 0 : index
    %136 = vector.load %arg9[%c29_128, %c0_129] : memref<49x128xf32, #tpu.memory_space<vmem>>, vector<3x128xf32>
    %c35_130 = arith.constant 35 : index
    %c0_131 = arith.constant 0 : index
    %137 = vector.load %arg9[%c35_130, %c0_131] : memref<49x128xf32, #tpu.memory_space<vmem>>, vector<3x128xf32>
    %c39_132 = arith.constant 39 : index
    %c0_133 = arith.constant 0 : index
    %138 = vector.load %arg9[%c39_132, %c0_133] : memref<49x128xf32, #tpu.memory_space<vmem>>, vector<3x128xf32>
    %c36_134 = arith.constant 36 : index
    %c0_135 = arith.constant 0 : index
    %139 = vector.load %arg9[%c36_134, %c0_135] : memref<49x128xf32, #tpu.memory_space<vmem>>, vector<3x128xf32>
    %c42_136 = arith.constant 42 : index
    %c0_137 = arith.constant 0 : index
    %140 = vector.load %arg9[%c42_136, %c0_137] : memref<49x128xf32, #tpu.memory_space<vmem>>, vector<3x128xf32>
    %c46_138 = arith.constant 46 : index
    %c0_139 = arith.constant 0 : index
    %141 = vector.load %arg9[%c46_138, %c0_139] : memref<49x128xf32, #tpu.memory_space<vmem>>, vector<3x128xf32>
    %c43_140 = arith.constant 43 : index
    %c0_141 = arith.constant 0 : index
    %142 = vector.load %arg9[%c43_140, %c0_141] : memref<49x128xf32, #tpu.memory_space<vmem>>, vector<3x128xf32>
    %143 = tpu.concatenate %134, %135, %136, %137, %138, %139, %140, %141, %142 in 1 : vector<3x128xf32>, vector<3x128xf32>, vector<3x128xf32>, vector<3x128xf32>, vector<3x128xf32>, vector<3x128xf32>, vector<3x128xf32>, vector<3x128xf32>, vector<3x128xf32> -> vector<3x1152xf32>
    %c6_142 = arith.constant 6 : index
    %c0_143 = arith.constant 0 : index
    %144 = vector.load %arg10[%c6_142, %c0_143] : memref<9x1152xf32, #tpu.memory_space<vmem>>, vector<3x1152xf32>
    tpu.vector_store %arg10[%c6_142, %c0_143], %143 {strides = array<i32>} : memref<9x1152xf32, #tpu.memory_space<vmem>>, vector<3x1152xf32>,
    %c0_144 = arith.constant 0 : index
    %c0_145 = arith.constant 0 : index
    %145 = vector.load %arg10[%c0_144, %c0_145] : memref<9x1152xf32, #tpu.memory_space<vmem>>, vector<9x1152xf32>
    %146 = arith.truncf %145 : vector<9x1152xf32> to vector<9x1152xbf16>
    %cst_146 = arith.constant dense<0.000000e+00> : vector<9x128xf32>
    %147 = tpu.matmul %146, %1, %cst_146 {dimension_numbers = #tpu.dot_dimension_numbers<[1], [0], [0], [1], [0, 0, 1, 1], [], []>} : vector<9x1152xbf16>, vector<1152x128xbf16>, vector<9x128xf32> -> vector<9x128xf32>
    %148 = vector.broadcast %3 : vector<1x128xf32> to vector<9x128xf32>
    %149 = arith.addf %147, %148 : vector<9x128xf32>
    %150 = arith.truncf %149 : vector<9x128xf32> to vector<9x128xbf16>
    %c1_147 = arith.constant 1 : index
    %c0_148 = arith.constant 0 : index
    %c0_149 = arith.constant 0 : index
    %151 = vector.load %arg8[%c1_147, %c0_148, %c0_149] : memref<2x9x128xbf16, #tpu.memory_space<vmem>>, vector<1x9x128xbf16>
    %152 = vector.shape_cast %151 : vector<1x9x128xbf16> to vector<9x128xbf16>
    %153 = vector.shape_cast %150 : vector<9x128xbf16> to vector<1x9x128xbf16>
    tpu.vector_store %arg8[%c1_147, %c0_148, %c0_149], %153 {strides = array<i32>} : memref<2x9x128xbf16, #tpu.memory_space<vmem>>, vector<1x9x128xbf16>,
    return
  }
  func.func @transform_0(%arg0: i32) -> (i32, i32, i32) {
    %c0_i32 = arith.constant 0 : i32
    %c0_i32_0 = arith.constant 0 : i32
    %c0_i32_1 = arith.constant 0 : i32
    return %arg0, %c0_i32, %c0_i32_0 : i32, i32, i32
  }
  func.func @transform_1(%arg0: i32) -> (i32, i32) {
    %c0_i32 = arith.constant 0 : i32
    %c0_i32_0 = arith.constant 0 : i32
    %c0_i32_1 = arith.constant 0 : i32
    return %c0_i32, %c0_i32_0 : i32, i32
  }
  func.func @transform_2(%arg0: i32) -> (i32, i32) {
    %c0_i32 = arith.constant 0 : i32
    %c0_i32_0 = arith.constant 0 : i32
    %c0_i32_1 = arith.constant 0 : i32
    return %c0_i32, %c0_i32_0 : i32, i32
  }
  func.func @transform_3(%arg0: i32) -> (i32, i32) {
    %c0_i32 = arith.constant 0 : i32
    %c0_i32_0 = arith.constant 0 : i32
    %c0_i32_1 = arith.constant 0 : i32
    return %c0_i32, %c0_i32_0 : i32, i32
  }
  func.func @transform_4(%arg0: i32) -> (i32, i32) {
    %c0_i32 = arith.constant 0 : i32
    %c0_i32_0 = arith.constant 0 : i32
    %c0_i32_1 = arith.constant 0 : i32
    return %c0_i32, %c0_i32_0 : i32, i32
  }
  func.func @transform_5(%arg0: i32) -> (i32, i32) {
    %c0_i32 = arith.constant 0 : i32
    %c0_i32_0 = arith.constant 0 : i32
    %c0_i32_1 = arith.constant 0 : i32
    return %c0_i32, %c0_i32_0 : i32, i32
  }
  func.func @transform_6(%arg0: i32) -> (i32, i32) {
    %c0_i32 = arith.constant 0 : i32
    %c0_i32_0 = arith.constant 0 : i32
    %c0_i32_1 = arith.constant 0 : i32
    return %c0_i32, %c0_i32_0 : i32, i32
  }
  func.func @transform_7(%arg0: i32) -> (i32, i32, i32) {
    %c0_i32 = arith.constant 0 : i32
    %c0_i32_0 = arith.constant 0 : i32
    %c0_i32_1 = arith.constant 0 : i32
    return %arg0, %c0_i32, %c0_i32_0 : i32, i32, i32
  }
}

</mosaic_0001>

<llo_original>
// kernel: patch_embed2.1
$region0: #{patch_embed2.1}
  #allocation0 [shape = 'u32[]', space=smem, size = 0x4, offset = 0x4, fixed_abs, tag = 'smem constant byte address 0x4 - core index']
  #allocation1 [shape = 'u32[72,128]{1,0:T(1,128)}', space=vmem, size = 0x9000, scoped, tag = 'internal scratch']
  #allocation2 [shape = 'f32[49,128]{1,0:T(8,128)}', space=vmem, size = 0x7000, scoped, tag = 'scratch operand']
  #allocation3 [shape = 'f32[9,1152]{1,0:T(8,128)}', space=vmem, size = 0x12000, scoped, tag = 'scratch operand']
  %s0 = inlined_call_operand.vmem [shape: bf16[2,49,192], index: 0, kind: input, shape index: {}]
  %s1 = inlined_call_operand.vmem [shape: bf16[192,128], index: 1, kind: input, shape index: {}]
  %s2 = inlined_call_operand.vmem [shape: f32[1,128], index: 2, kind: input, shape index: {}]
  %s3 = inlined_call_operand.vmem [shape: f32[1,128], index: 3, kind: input, shape index: {}]
  %s4 = inlined_call_operand.vmem [shape: f32[1,128], index: 4, kind: input, shape index: {}]
  %s5 = inlined_call_operand.vmem [shape: bf16[1152,128], index: 5, kind: input, shape index: {}]
  %s6 = inlined_call_operand.vmem [shape: f32[1,128], index: 6, kind: input, shape index: {}]
  %s7 = inlined_call_operand.vmem [shape: bf16[2,9,128], index: 7, kind: output, shape index: {}]
  %s8 = sld [smem:[#allocation0]]
  $region38: #{patch_embed2.1} parent=0
    _
  %s10 = ssub.s32 1, %s8
  %s11 = scalar_select 0, %s10, %s8
  // Predicated region
  $region2: #{patch_embed2.1} parent=0 // pred_check
    _
  $region3: #{patch_embed2.1} parent=0 // pred_check_branch
    %13 = sbr.rel (0) target = $region5
  $region4: #{patch_embed2.1} parent=0 // pred_region
    _
  $region5: #{patch_embed2.1} parent=0 // pred_fallthru
    _
  // Predicated region
  $region6: #{patch_embed2.1} parent=0 // pred_check
    _
  $region7: #{patch_embed2.1} parent=0 // pred_check_branch
    %15 = sbr.rel (0) target = $region9
  $region8: #{patch_embed2.1} parent=0 // pred_region
    _
  $region9: #{patch_embed2.1} parent=0 // pred_fallthru
    _
  // Predicated region
  $region10: #{patch_embed2.1} parent=0 // pred_check
    _
  $region11: #{patch_embed2.1} parent=0 // pred_check_branch
    %17 = sbr.rel (0) target = $region13
  $region12: #{patch_embed2.1} parent=0 // pred_region
    _
  $region13: #{patch_embed2.1} parent=0 // pred_fallthru
    _
  // Predicated region
  $region14: #{patch_embed2.1} parent=0 // pred_check
    _
  $region15: #{patch_embed2.1} parent=0 // pred_check_branch
    %19 = sbr.rel (0) target = $region17
  $region16: #{patch_embed2.1} parent=0 // pred_region
    _
  $region17: #{patch_embed2.1} parent=0 // pred_fallthru
    _
  // Predicated region
  $region18: #{patch_embed2.1} parent=0 // pred_check
    _
  $region19: #{patch_embed2.1} parent=0 // pred_check_branch
    %21 = sbr.rel (0) target = $region21
  $region20: #{patch_embed2.1} parent=0 // pred_region
    _
  $region21: #{patch_embed2.1} parent=0 // pred_fallthru
    _
  // Predicated region
  $region22: #{patch_embed2.1} parent=0 // pred_check
    _
  $region23: #{patch_embed2.1} parent=0 // pred_check_branch
    %23 = sbr.rel (0) target = $region25
  $region24: #{patch_embed2.1} parent=0 // pred_region
    _
  $region25: #{patch_embed2.1} parent=0 // pred_fallthru
    _
  // Predicated region
  $region26: #{patch_embed2.1} parent=0 // pred_check
    _
  $region27: #{patch_embed2.1} parent=0 // pred_check_branch
    %25 = sbr.rel (0) target = $region29
  $region28: #{patch_embed2.1} parent=0 // pred_region
    _
  $region29: #{patch_embed2.1} parent=0 // pred_fallthru
    _
  %v27 = vld [vmem:[%s1] sm:$0xf]
  %v28 = vld [vmem:[%s1 + $0x4] sm:$0xf]
  %v29 = vld [vmem:[%s1 + $0x8] sm:$0xf]
  %v30 = vld [vmem:[%s1 + $0xc] sm:$0xf]
  %v31 = vld [vmem:[%s1 + $0x10] sm:$0xf]
  %v32 = vld [vmem:[%s1 + $0x14] sm:$0xf]
  %v33 = vld [vmem:[%s1 + $0x18] sm:$0xf]
  %v34 = vld [vmem:[%s1 + $0x1c] sm:$0xf]
  %v35 = vld [vmem:[%s1 + $0x20] sm:$0xf]
  %v36 = vld [vmem:[%s1 + $0x24] sm:$0xf]
  %v37 = vld [vmem:[%s1 + $0x28] sm:$0xf]
  %v38 = vld [vmem:[%s1 + $0x2c] sm:$0xf]
  %v39 = vld [vmem:[%s1 + $0x30] sm:$0xf]
  %v40 = vld [vmem:[%s1 + $0x34] sm:$0xf]
  %v41 = vld [vmem:[%s1 + $0x38] sm:$0xf]
  %v42 = vld [vmem:[%s1 + $0x3c] sm:$0xf]
  %v43 = vld [vmem:[%s1 + $0x40] sm:$0xf]
  %v44 = vld [vmem:[%s1 + $0x44] sm:$0xf]
  %v45 = vld [vmem:[%s1 + $0x48] sm:$0xf]
  %v46 = vld [vmem:[%s1 + $0x4c] sm:$0xf]
  %v47 = vld [vmem:[%s1 + $0x50] sm:$0xf]
  %v48 = vld [vmem:[%s1 + $0x54] sm:$0xf]
  %v49 = vld [vmem:[%s1 + $0x58] sm:$0xf]
  %v50 = vld [vmem:[%s1 + $0x5c] sm:$0xf]
  %v51 = vld [vmem:[%s5] sm:$0xf]
  %v52 = vld [vmem:[%s5 + $0x4] sm:$0xf]
  %v53 = vld [vmem:[%s5 + $0x8] sm:$0xf]
  %v54 = vld [vmem:[%s5 + $0xc] sm:$0xf]
  %v55 = vld [vmem:[%s5 + $0x10] sm:$0xf]
  %v56 = vld [vmem:[%s5 + $0x14] sm:$0xf]
  %v57 = vld [vmem:[%s5 + $0x18] sm:$0xf]
  %v58 = vld [vmem:[%s5 + $0x1c] sm:$0xf]
  %v59 = vld [vmem:[%s5 + $0x20] sm:$0xf]
  %v60 = vld [vmem:[%s5 + $0x24] sm:$0xf]
  %v61 = vld [vmem:[%s5 + $0x28] sm:$0xf]
  %v62 = vld [vmem:[%s5 + $0x2c] sm:$0xf]
  %v63 = vld [vmem:[%s5 + $0x30] sm:$0xf]
  %v64 = vld [vmem:[%s5 + $0x34] sm:$0xf]
  %v65 = vld [vmem:[%s5 + $0x38] sm:$0xf]
  %v66 = vld [vmem:[%s5 + $0x3c] sm:$0xf]
  %v67 = vld [vmem:[%s5 + $0x40] sm:$0xf]
  %v68 = vld [vmem:[%s5 + $0x44] sm:$0xf]
  %v69 = vld [vmem:[%s5 + $0x48] sm:$0xf]
  %v70 = vld [vmem:[%s5 + $0x4c] sm:$0xf]
  %v71 = vld [vmem:[%s5 + $0x50] sm:$0xf]
  %v72 = vld [vmem:[%s5 + $0x54] sm:$0xf]
  %v73 = vld [vmem:[%s5 + $0x58] sm:$0xf]
  %v74 = vld [vmem:[%s5 + $0x5c] sm:$0xf]
  %v75 = vld [vmem:[%s5 + $0x60] sm:$0xf]
  %v76 = vld [vmem:[%s5 + $0x64] sm:$0xf]
  %v77 = vld [vmem:[%s5 + $0x68] sm:$0xf]
  %v78 = vld [vmem:[%s5 + $0x6c] sm:$0xf]
  %v79 = vld [vmem:[%s5 + $0x70] sm:$0xf]
  %v80 = vld [vmem:[%s5 + $0x74] sm:$0xf]
  %v81 = vld [vmem:[%s5 + $0x78] sm:$0xf]
  %v82 = vld [vmem:[%s5 + $0x7c] sm:$0xf]
  %v83 = vld [vmem:[%s5 + $0x80] sm:$0xf]
  %v84 = vld [vmem:[%s5 + $0x84] sm:$0xf]
  %v85 = vld [vmem:[%s5 + $0x88] sm:$0xf]
  %v86 = vld [vmem:[%s5 + $0x8c] sm:$0xf]
  %v87 = vld [vmem:[%s5 + $0x90] sm:$0xf]
  %v88 = vld [vmem:[%s5 + $0x94] sm:$0xf]
  %v89 = vld [vmem:[%s5 + $0x98] sm:$0xf]
  %v90 = vld [vmem:[%s5 + $0x9c] sm:$0xf]
  %v91 = vld [vmem:[%s5 + $0xa0] sm:$0xf]
  %v92 = vld [vmem:[%s5 + $0xa4] sm:$0xf]
  %v93 = vld [vmem:[%s5 + $0xa8] sm:$0xf]
  %v94 = vld [vmem:[%s5 + $0xac] sm:$0xf]
  %v95 = vld [vmem:[%s5 + $0xb0] sm:$0xf]
  %v96 = vld [vmem:[%s5 + $0xb4] sm:$0xf]
  %v97 = vld [vmem:[%s5 + $0xb8] sm:$0xf]
  %v98 = vld [vmem:[%s5 + $0xbc] sm:$0xf]
  %v99 = vld [vmem:[%s5 + $0xc0] sm:$0xf]
  %v100 = vld [vmem:[%s5 + $0xc4] sm:$0xf]
  %v101 = vld [vmem:[%s5 + $0xc8] sm:$0xf]
  %v102 = vld [vmem:[%s5 + $0xcc] sm:$0xf]
  %v103 = vld [vmem:[%s5 + $0xd0] sm:$0xf]
  %v104 = vld [vmem:[%s5 + $0xd4] sm:$0xf]
  %v105 = vld [vmem:[%s5 + $0xd8] sm:$0xf]
  %v106 = vld [vmem:[%s5 + $0xdc] sm:$0xf]
  %v107 = vld [vmem:[%s5 + $0xe0] sm:$0xf]
  %v108 = vld [vmem:[%s5 + $0xe4] sm:$0xf]
  %v109 = vld [vmem:[%s5 + $0xe8] sm:$0xf]
  %v110 = vld [vmem:[%s5 + $0xec] sm:$0xf]
  %v111 = vld [vmem:[%s5 + $0xf0] sm:$0xf]
  %v112 = vld [vmem:[%s5 + $0xf4] sm:$0xf]
  %v113 = vld [vmem:[%s5 + $0xf8] sm:$0xf]
  %v114 = vld [vmem:[%s5 + $0xfc] sm:$0xf]
  %v115 = vld [vmem:[%s5 + $0x100] sm:$0xf]
  %v116 = vld [vmem:[%s5 + $0x104] sm:$0xf]
  %v117 = vld [vmem:[%s5 + $0x108] sm:$0xf]
  %v118 = vld [vmem:[%s5 + $0x10c] sm:$0xf]
  %v119 = vld [vmem:[%s5 + $0x110] sm:$0xf]
  %v120 = vld [vmem:[%s5 + $0x114] sm:$0xf]
  %v121 = vld [vmem:[%s5 + $0x118] sm:$0xf]
  %v122 = vld [vmem:[%s5 + $0x11c] sm:$0xf]
  %v123 = vld [vmem:[%s5 + $0x120] sm:$0xf]
  %v124 = vld [vmem:[%s5 + $0x124] sm:$0xf]
  %v125 = vld [vmem:[%s5 + $0x128] sm:$0xf]
  %v126 = vld [vmem:[%s5 + $0x12c] sm:$0xf]
  %v127 = vld [vmem:[%s5 + $0x130] sm:$0xf]
  %v128 = vld [vmem:[%s5 + $0x134] sm:$0xf]
  %v129 = vld [vmem:[%s5 + $0x138] sm:$0xf]
  %v130 = vld [vmem:[%s5 + $0x13c] sm:$0xf]
  %v131 = vld [vmem:[%s5 + $0x140] sm:$0xf]
  %v132 = vld [vmem:[%s5 + $0x144] sm:$0xf]
  %v133 = vld [vmem:[%s5 + $0x148] sm:$0xf]
  %v134 = vld [vmem:[%s5 + $0x14c] sm:$0xf]
  %v135 = vld [vmem:[%s5 + $0x150] sm:$0xf]
  %v136 = vld [vmem:[%s5 + $0x154] sm:$0xf]
  %v137 = vld [vmem:[%s5 + $0x158] sm:$0xf]
  %v138 = vld [vmem:[%s5 + $0x15c] sm:$0xf]
  %v139 = vld [vmem:[%s5 + $0x160] sm:$0xf]
  %v140 = vld [vmem:[%s5 + $0x164] sm:$0xf]
  %v141 = vld [vmem:[%s5 + $0x168] sm:$0xf]
  %v142 = vld [vmem:[%s5 + $0x16c] sm:$0xf]
  %v143 = vld [vmem:[%s5 + $0x170] sm:$0xf]
  %v144 = vld [vmem:[%s5 + $0x174] sm:$0xf]
  %v145 = vld [vmem:[%s5 + $0x178] sm:$0xf]
  %v146 = vld [vmem:[%s5 + $0x17c] sm:$0xf]
  %v147 = vld [vmem:[%s5 + $0x180] sm:$0xf]
  %v148 = vld [vmem:[%s5 + $0x184] sm:$0xf]
  %v149 = vld [vmem:[%s5 + $0x188] sm:$0xf]
  %v150 = vld [vmem:[%s5 + $0x18c] sm:$0xf]
  %v151 = vld [vmem:[%s5 + $0x190] sm:$0xf]
  %v152 = vld [vmem:[%s5 + $0x194] sm:$0xf]
  %v153 = vld [vmem:[%s5 + $0x198] sm:$0xf]
  %v154 = vld [vmem:[%s5 + $0x19c] sm:$0xf]
  %v155 = vld [vmem:[%s5 + $0x1a0] sm:$0xf]
  %v156 = vld [vmem:[%s5 + $0x1a4] sm:$0xf]
  %v157 = vld [vmem:[%s5 + $0x1a8] sm:$0xf]
  %v158 = vld [vmem:[%s5 + $0x1ac] sm:$0xf]
  %v159 = vld [vmem:[%s5 + $0x1b0] sm:$0xf]
  %v160 = vld [vmem:[%s5 + $0x1b4] sm:$0xf]
  %v161 = vld [vmem:[%s5 + $0x1b8] sm:$0xf]
  %v162 = vld [vmem:[%s5 + $0x1bc] sm:$0xf]
  %v163 = vld [vmem:[%s5 + $0x1c0] sm:$0xf]
  %v164 = vld [vmem:[%s5 + $0x1c4] sm:$0xf]
  %v165 = vld [vmem:[%s5 + $0x1c8] sm:$0xf]
  %v166 = vld [vmem:[%s5 + $0x1cc] sm:$0xf]
  %v167 = vld [vmem:[%s5 + $0x1d0] sm:$0xf]
  %v168 = vld [vmem:[%s5 + $0x1d4] sm:$0xf]
  %v169 = vld [vmem:[%s5 + $0x1d8] sm:$0xf]
  %v170 = vld [vmem:[%s5 + $0x1dc] sm:$0xf]
  %v171 = vld [vmem:[%s5 + $0x1e0] sm:$0xf]
  %v172 = vld [vmem:[%s5 + $0x1e4] sm:$0xf]
  %v173 = vld [vmem:[%s5 + $0x1e8] sm:$0xf]
  %v174 = vld [vmem:[%s5 + $0x1ec] sm:$0xf]
  %v175 = vld [vmem:[%s5 + $0x1f0] sm:$0xf]
  %v176 = vld [vmem:[%s5 + $0x1f4] sm:$0xf]
  %v177 = vld [vmem:[%s5 + $0x1f8] sm:$0xf]
  %v178 = vld [vmem:[%s5 + $0x1fc] sm:$0xf]
  %v179 = vld [vmem:[%s5 + $0x200] sm:$0xf]
  %v180 = vld [vmem:[%s5 + $0x204] sm:$0xf]
  %v181 = vld [vmem:[%s5 + $0x208] sm:$0xf]
  %v182 = vld [vmem:[%s5 + $0x20c] sm:$0xf]
  %v183 = vld [vmem:[%s5 + $0x210] sm:$0xf]
  %v184 = vld [vmem:[%s5 + $0x214] sm:$0xf]
  %v185 = vld [vmem:[%s5 + $0x218] sm:$0xf]
  %v186 = vld [vmem:[%s5 + $0x21c] sm:$0xf]
  %v187 = vld [vmem:[%s5 + $0x220] sm:$0xf]
  %v188 = vld [vmem:[%s5 + $0x224] sm:$0xf]
  %v189 = vld [vmem:[%s5 + $0x228] sm:$0xf]
  %v190 = vld [vmem:[%s5 + $0x22c] sm:$0xf]
  %v191 = vld [vmem:[%s5 + $0x230] sm:$0xf]
  %v192 = vld [vmem:[%s5 + $0x234] sm:$0xf]
  %v193 = vld [vmem:[%s5 + $0x238] sm:$0xf]
  %v194 = vld [vmem:[%s5 + $0x23c] sm:$0xf]
  %v195 = vld [vmem:[%s2] sm:$0x1]
  %v196 = vld [vmem:[%s6] sm:$0x1]
  %v197 = vld [vmem:[%s0] sm:$0xff]
  %v198 = vld [vmem:[%s0 + $0x8] sm:$0xff]
  %v199 = vld [vmem:[%s0 + $0x10] sm:$0xff]
  %v200 = vld [vmem:[%s0 + $0x18] sm:$0xff]
  %v201 = vld [vmem:[%s0 + $0x20] sm:$0xff]
  %v202 = vld [vmem:[%s0 + $0x28] sm:$0xff]
  %v203 = vld [vmem:[%s0 + $0x30] sm:$0x11]
  %v205 = vperm.slane %v195, 0
  %v214 = vunpack.c.l.b16 %v197
  %v215 = vunpack.c.h.b16 %v197
  %v216 = vunpack.c.l.b16 %v198
  %v217 = vunpack.c.h.b16 %v198
  %v218 = vunpack.c.l.b16 %v199
  %v219 = vunpack.c.h.b16 %v199
  %v220 = vunpack.c.l.b16 %v200
  %v221 = vunpack.c.h.b16 %v200
  %v222 = vunpack.c.l.b16 %v201
  %v223 = vunpack.c.h.b16 %v201
  %v224 = vunpack.c.l.b16 %v202
  %v225 = vunpack.c.h.b16 %v202
  %v226 = vunpack.c.l.b16 %v203
  %v227 = vunpack.c.h.b16 %v203
  %v228 = vpack.c.b16 %v216, %v214
  %v229 = vpack.c.b16 %v217, %v215
  %v230 = vpack.c.b16 %v220, %v218
  %v231 = vpack.c.b16 %v221, %v219
  %v232 = vpack.c.b16 %v224, %v222
  %v233 = vpack.c.b16 %v225, %v223
  %v234 = vpack.c.b16 %v226, %v226
  %v235 = vpack.c.b16 %v227, %v227
  %v264 = vunpack.c.l.b16 %v27
  %v265 = vunpack.c.l.b16 %v28
  %v266 = vunpack.c.l.b16 %v29
  %v267 = vunpack.c.l.b16 %v30
  %v268 = vunpack.c.l.b16 %v31
  %v269 = vunpack.c.l.b16 %v32
  %v270 = vunpack.c.l.b16 %v33
  %v271 = vunpack.c.l.b16 %v34
  %v272 = vunpack.c.l.b16 %v35
  %v273 = vunpack.c.l.b16 %v36
  %v274 = vunpack.c.l.b16 %v37
  %v275 = vunpack.c.l.b16 %v38
  %v276 = vunpack.c.l.b16 %v39
  %v277 = vunpack.c.l.b16 %v40
  %v278 = vunpack.c.l.b16 %v41
  %v279 = vunpack.c.l.b16 %v42
  %v280 = vunpack.c.l.b16 %v43
  %v281 = vunpack.c.l.b16 %v44
  %v282 = vunpack.c.l.b16 %v45
  %v283 = vunpack.c.l.b16 %v46
  %v284 = vunpack.c.l.b16 %v47
  %v285 = vunpack.c.l.b16 %v48
  %v286 = vunpack.c.l.b16 %v49
  %v287 = vunpack.c.l.b16 %v50
  %v288 = vpack.c.b16 %v265, %v264
  %v289 = vpack.c.b16 %v267, %v266
  %v290 = vpack.c.b16 %v269, %v268
  %v291 = vpack.c.b16 %v271, %v270
  %v292 = vpack.c.b16 %v273, %v272
  %v293 = vpack.c.b16 %v275, %v274
  %v294 = vpack.c.b16 %v277, %v276
  %v295 = vpack.c.b16 %v279, %v278
  %v296 = vpack.c.b16 %v281, %v280
  %v297 = vpack.c.b16 %v283, %v282
  %v298 = vpack.c.b16 %v285, %v284
  %v299 = vpack.c.b16 %v287, %v286
  %vm312 = vcmask 523264
  %v314 = vsel %vm312, %v229, 0
  %v317 = vsel %vm312, %v231, 0
  %v320 = vsel %vm312, %v233, 0
  %v323 = vsel %vm312, %v235, 0
  %325 = vmatpush.bf16.msra.mxu0 %v295
  %326 = vmatpush.bf16.msra.mxu0 %v294
  %327 = vmatpush.bf16.msra.mxu0 %v293
  %328 = vmatpush.bf16.msra.mxu0 %v292
  %329 = vmatpush.bf16.msra.mxu0 %v291
  %330 = vmatpush.bf16.msra.mxu0 %v290
  %331 = vmatpush.bf16.msra.mxu0 %v289
  %332 = vmatpush.bf16.msra.mxu0 %v288
  %333 = vmatmul.bf16.gmra.mxu0 %v228
  %v334 = vpop.f32.mrf.mxu0
  %v335 = vadd.f32 %v205, %v334
  %v336 = vpop.f32.mrf.mxu0
  %v337 = vadd.f32 %v205, %v336
  %338 = vmatmul.bf16.gmra.mxu0 %v230
  %v339 = vpop.f32.mrf.mxu0
  %v340 = vadd.f32 %v205, %v339
  %v341 = vpop.f32.mrf.mxu0
  %v342 = vadd.f32 %v205, %v341
  %343 = vmatmul.bf16.gmra.mxu0 %v232
  %v344 = vpop.f32.mrf.mxu0
  %v345 = vadd.f32 %v205, %v344
  %v346 = vpop.f32.mrf.mxu0
  %v347 = vadd.f32 %v205, %v346
  %348 = vmatmul.bf16.gmra.mxu0 %v234
  %v349 = vpop.f32.mrf.mxu0
  %v350 = vadd.f32 %v205, %v349
  %v351 = vpop.f32.mrf.mxu0
  %352 = vdwg.mxu0
  %353 = vmatpush.bf16.msra.mxu0 0
  %354 = vmatpush.bf16.msra.mxu0 0
  %355 = vmatpush.bf16.msra.mxu0 0
  %356 = vmatpush.bf16.msra.mxu0 0
  %357 = vmatpush.bf16.msra.mxu0 %v299
  %358 = vmatpush.bf16.msra.mxu0 %v298
  %359 = vmatpush.bf16.msra.mxu0 %v297
  %360 = vmatpush.bf16.msra.mxu0 %v296
  %361 = vmatmul.bf16.gmra.mxu0 %v314
  %v362 = vpop.f32.mrf.mxu0
  %v363 = vadd.f32 %v335, %v362
  %v364 = vpop.f32.mrf.mxu0
  %v365 = vadd.f32 %v337, %v364
  %366 = vmatmul.bf16.gmra.mxu0 %v317
  %v367 = vpop.f32.mrf.mxu0
  %v368 = vadd.f32 %v340, %v367
  %v369 = vpop.f32.mrf.mxu0
  %v370 = vadd.f32 %v342, %v369
  %371 = vmatmul.bf16.gmra.mxu0 %v320
  %v372 = vpop.f32.mrf.mxu0
  %v373 = vadd.f32 %v345, %v372
  %v374 = vpop.f32.mrf.mxu0
  %v375 = vadd.f32 %v347, %v374
  %376 = vmatmul.bf16.gmra.mxu0 %v323
  %v377 = vpop.f32.mrf.mxu0
  %v378 = vadd.f32 %v350, %v377
  %v379 = vpop.f32.mrf.mxu0
  %380 = vdwg.mxu0
  %v381 = vadd.f32 %v363, %v365
  %v382 = vadd.f32 %v381, %v368
  %v383 = vadd.f32 %v382, %v370
  %v384 = vadd.f32 %v383, %v373
  %v385 = vadd.f32 %v384, %v375
  %vm386 = vcmask 1040384
  %v387 = vsel %vm386, %v378, 0.0
  %v388 = vadd.f32 %v385, %v387
  %v389 = vrot.slane %v388, 4
  %v390 = vadd.f32 %v388, %v389
  %v391 = vrot.slane %v390, 2
  %v392 = vadd.f32 %v390, %v391
  %v393 = vrot.slane %v392, 1
  %v394 = vadd.f32 %v392, %v393
  %v395 = vrcp.pop 49.0
  %v396 = vmul.f32 49.0, %v395
  %v397 = vsub.f32 1.0, %v396
  %v398 = vmul.f32 %v395, %v397
  %v399 = vadd.f32 %v395, %v398
  %vm400 = vweird.f32 %v395
  %v401 = vsel %vm400, %v395, %v399
  %v402 = vmul.f32 %v394, %v401
  %v403 = vmul.f32 %v363, %v363
  %v404 = vmul.f32 %v365, %v365
  %v405 = vmul.f32 %v368, %v368
  %v406 = vmul.f32 %v370, %v370
  %v407 = vmul.f32 %v373, %v373
  %v408 = vmul.f32 %v375, %v375
  %v409 = vmul.f32 %v378, %v378
  %v410 = vadd.f32 %v403, %v404
  %v411 = vadd.f32 %v410, %v405
  %v412 = vadd.f32 %v411, %v406
  %v413 = vadd.f32 %v412, %v407
  %v414 = vadd.f32 %v413, %v408
  %v415 = vsel %vm386, %v409, 0.0
  %v416 = vadd.f32 %v414, %v415
  %v417 = vrot.slane %v416, 4
  %v418 = vadd.f32 %v416, %v417
  %v419 = vrot.slane %v418, 2
  %v420 = vadd.f32 %v418, %v419
  %v421 = vrot.slane %v420, 1
  %v422 = vadd.f32 %v420, %v421
  %v423 = vmul.f32 %v422, %v401
  %v424 = vmul.f32 %v402, %v402
  %v425 = vsub.f32 %v423, %v424
  %v426 = vmax.f32 %v425, 0.0
  %v427 = vld [vmem:[%s3] sm:$0x1]
  %v428 = vadd.f32 %v426, 1e-05
  %v429 = vrsqrt.pop %v428
  %v430 = vmul.f32 %v429, %v428
  %v431 = vmul.f32 %v430, %v429
  %v432 = vmul.f32 0.5, %v431
  %v433 = vsub.f32 1.5, %v432
  %v434 = vmul.f32 %v429, %v433
  %vm435 = vweird.f32 %v428
  %vm436 = vweird.f32 %v429
  %vm437 = vmor %vm435, %vm436
  %v438 = vsel %vm437, %v429, %v434
  %v439 = vmul.f32 %v427, %v438
  %v440 = vld [vmem:[%s4] sm:$0x1]
  %v441 = vmul.f32 %v402, %v439
  %v442 = vsub.f32 %v440, %v441
  %v444 = vperm.slane %v439, 0
  %v446 = vmul.f32 %v363, %v444
  %v447 = vmul.f32 %v365, %v444
  %v448 = vmul.f32 %v368, %v444
  %v449 = vmul.f32 %v370, %v444
  %v450 = vmul.f32 %v373, %v444
  %v451 = vmul.f32 %v375, %v444
  %v452 = vmul.f32 %v378, %v444
  %v454 = vperm.slane %v442, 0
  %v456 = vadd.f32 %v446, %v454
  %v457 = vadd.f32 %v447, %v454
  %v458 = vadd.f32 %v448, %v454
  %v459 = vadd.f32 %v449, %v454
  %v460 = vadd.f32 %v450, %v454
  %v461 = vadd.f32 %v451, %v454
  %v462 = vadd.f32 %v452, %v454
  %v463 = vmax.f32 %v456, 0.0
  %v464 = vmax.f32 %v457, 0.0
  %v465 = vmax.f32 %v458, 0.0
  %v466 = vmax.f32 %v459, 0.0
  %v467 = vmax.f32 %v460, 0.0
  %v468 = vmax.f32 %v461, 0.0
  %v469 = vmax.f32 %v462, 0.0
  %470 = vst [vmem:[#allocation2] sm:$0xff] %v463
  %471 = vst [vmem:[#allocation2 + $0x8] sm:$0xff] %v464
  %472 = vst [vmem:[#allocation2 + $0x10] sm:$0xff] %v465
  %473 = vst [vmem:[#allocation2 + $0x18] sm:$0xff] %v466
  %474 = vst [vmem:[#allocation2 + $0x20] sm:$0xff] %v467
  %475 = vst [vmem:[#allocation2 + $0x28] sm:$0xff] %v468
  %476 = vst [vmem:[#allocation2 + $0x30] sm:$0x1] %v469
  %v477 = vld [vmem:[#allocation2] sm:$0x7]
  %v478 = vld [vmem:[#allocation2 + $0x4] sm:$0x7]
  %v479 = vld [vmem:[#allocation2 + $0x1] sm:$0x7]
  %v480 = vld [vmem:[#allocation2 + $0x7] sm:$0x7]
  %v481 = vld [vmem:[#allocation2 + $0xb] sm:$0x7]
  %v482 = vld [vmem:[#allocation2 + $0x8] sm:$0x7]
  %v483 = vld [vmem:[#allocation2 + $0xe] sm:$0x7]
  %v484 = vld [vmem:[#allocation2 + $0x12] sm:$0x7]
  %v485 = vld [vmem:[#allocation2 + $0xf] sm:$0x7]
  %486 = vst [vmem:[#allocation3] sm:$0x7] %v477
  %487 = vst [vmem:[#allocation3 + $0x8] sm:$0x7] %v478
  %488 = vst [vmem:[#allocation3 + $0x10] sm:$0x7] %v479
  %489 = vst [vmem:[#allocation3 + $0x18] sm:$0x7] %v480
  %490 = vst [vmem:[#allocation3 + $0x20] sm:$0x7] %v481
  %491 = vst [vmem:[#allocation3 + $0x28] sm:$0x7] %v482
  %492 = vst [vmem:[#allocation3 + $0x30] sm:$0x7] %v483
  %493 = vst [vmem:[#allocation3 + $0x38] sm:$0x7] %v484
  %494 = vst [vmem:[#allocation3 + $0x40] sm:$0x7] %v485
  %v495 = vld [vmem:[#allocation2 + $0xe] sm:$0x7]
  %v496 = vld [vmem:[#allocation2 + $0x12] sm:$0x7]
  %v497 = vld [vmem:[#allocation2 + $0xf] sm:$0x7]
  %v498 = vld [vmem:[#allocation2 + $0x15] sm:$0x7]
  %v499 = vld [vmem:[#allocation2 + $0x19] sm:$0x7]
  %v500 = vld [vmem:[#allocation2 + $0x16] sm:$0x7]
  %v501 = vld [vmem:[#allocation2 + $0x1c] sm:$0x7]
  %v502 = vld [vmem:[#allocation2 + $0x20] sm:$0x7]
  %v503 = vld [vmem:[#allocation2 + $0x1d] sm:$0x7]
  %v513 = vrot.slane %v495, 5
  %v514 = vrot.slane %v496, 5
  %v515 = vrot.slane %v497, 5
  %v516 = vrot.slane %v498, 5
  %v517 = vrot.slane %v499, 5
  %v518 = vrot.slane %v500, 5
  %v519 = vrot.slane %v501, 5
  %v520 = vrot.slane %v502, 5
  %v521 = vrot.slane %v503, 5
  %531 = vst [vmem:[#allocation3] sm:$0x38] %v513
  %532 = vst [vmem:[#allocation3 + $0x8] sm:$0x38] %v514
  %533 = vst [vmem:[#allocation3 + $0x10] sm:$0x38] %v515
  %534 = vst [vmem:[#allocation3 + $0x18] sm:$0x38] %v516
  %535 = vst [vmem:[#allocation3 + $0x20] sm:$0x38] %v517
  %536 = vst [vmem:[#allocation3 + $0x28] sm:$0x38] %v518
  %537 = vst [vmem:[#allocation3 + $0x30] sm:$0x38] %v519
  %538 = vst [vmem:[#allocation3 + $0x38] sm:$0x38] %v520
  %539 = vst [vmem:[#allocation3 + $0x40] sm:$0x38] %v521
  %v540 = vld [vmem:[#allocation2 + $0x1c] sm:$0x7]
  %v541 = vld [vmem:[#allocation2 + $0x20] sm:$0x7]
  %v542 = vld [vmem:[#allocation2 + $0x1d] sm:$0x7]
  %v543 = vld [vmem:[#allocation2 + $0x23] sm:$0x7]
  %v544 = vld [vmem:[#allocation2 + $0x27] sm:$0x7]
  %v545 = vld [vmem:[#allocation2 + $0x24] sm:$0x7]
  %v546 = vld [vmem:[#allocation2 + $0x2a] sm:$0x7]
  %v547 = vld [vmem:[#allocation2 + $0x2e] sm:$0x7]
  %v548 = vld [vmem:[#allocation2 + $0x2b] sm:$0x7]
  %v558 = vrot.slane %v540, 2
  %v559 = vrot.slane %v541, 2
  %v560 = vrot.slane %v542, 2
  %v561 = vrot.slane %v543, 2
  %v562 = vrot.slane %v544, 2
  %v563 = vrot.slane %v545, 2
  %v564 = vrot.slane %v546, 2
  %v565 = vrot.slane %v547, 2
  %v566 = vrot.slane %v548, 2
  %576 = vst [vmem:[#allocation3] sm:$0xc0] %v558
  %577 = vst [vmem:[#allocation3 + $0x8] sm:$0xc0] %v559
  %578 = vst [vmem:[#allocation3 + $0x10] sm:$0xc0] %v560
  %579 = vst [vmem:[#allocation3 + $0x18] sm:$0xc0] %v561
  %580 = vst [vmem:[#allocation3 + $0x20] sm:$0xc0] %v562
  %581 = vst [vmem:[#allocation3 + $0x28] sm:$0xc0] %v563
  %582 = vst [vmem:[#allocation3 + $0x30] sm:$0xc0] %v564
  %583 = vst [vmem:[#allocation3 + $0x38] sm:$0xc0] %v565
  %584 = vst [vmem:[#allocation3 + $0x40] sm:$0xc0] %v566
  %585 = vst [vmem:[#allocation3 + $0x48] sm:$0x1] %v558
  %586 = vst [vmem:[#allocation3 + $0x50] sm:$0x1] %v559
  %587 = vst [vmem:[#allocation3 + $0x58] sm:$0x1] %v560
  %588 = vst [vmem:[#allocation3 + $0x60] sm:$0x1] %v561
  %589 = vst [vmem:[#allocation3 + $0x68] sm:$0x1] %v562
  %590 = vst [vmem:[#allocation3 + $0x70] sm:$0x1] %v563
  %591 = vst [vmem:[#allocation3 + $0x78] sm:$0x1] %v564
  %592 = vst [vmem:[#allocation3 + $0x80] sm:$0x1] %v565
  %593 = vst [vmem:[#allocation3 + $0x88] sm:$0x1] %v566
  %v594 = vld [vmem:[#allocation3] sm:$0xff]
  %v595 = vld [vmem:[#allocation3 + $0x8] sm:$0xff]
  %v596 = vld [vmem:[#allocation3 + $0x10] sm:$0xff]
  %v597 = vld [vmem:[#allocation3 + $0x18] sm:$0xff]
  %v598 = vld [vmem:[#allocation3 + $0x20] sm:$0xff]
  %v599 = vld [vmem:[#allocation3 + $0x28] sm:$0xff]
  %v600 = vld [vmem:[#allocation3 + $0x30] sm:$0xff]
  %v601 = vld [vmem:[#allocation3 + $0x38] sm:$0xff]
  %v602 = vld [vmem:[#allocation3 + $0x40] sm:$0xff]
  %v603 = vld [vmem:[#allocation3 + $0x48] sm:$0x1]
  %v604 = vld [vmem:[#allocation3 + $0x50] sm:$0x1]
  %v605 = vld [vmem:[#allocation3 + $0x58] sm:$0x1]
  %v606 = vld [vmem:[#allocation3 + $0x60] sm:$0x1]
  %v607 = vld [vmem:[#allocation3 + $0x68] sm:$0x1]
  %v608 = vld [vmem:[#allocation3 + $0x70] sm:$0x1]
  %v609 = vld [vmem:[#allocation3 + $0x78] sm:$0x1]
  %v610 = vld [vmem:[#allocation3 + $0x80] sm:$0x1]
  %v611 = vld [vmem:[#allocation3 + $0x88] sm:$0x1]
  %v612 = vpack.c.bf16 %v603, %v594
  %v613 = vpack.c.bf16 %v604, %v595
  %v614 = vpack.c.bf16 %v605, %v596
  %v615 = vpack.c.bf16 %v606, %v597
  %v616 = vpack.c.bf16 %v607, %v598
  %v617 = vpack.c.bf16 %v608, %v599
  %v618 = vpack.c.bf16 %v609, %v600
  %v619 = vpack.c.bf16 %v610, %v601
  %v620 = vpack.c.bf16 %v611, %v602
  %v622 = vperm.slane %v196, 0
  %v768 = vunpack.c.l.b16 %v51
  %v769 = vunpack.c.l.b16 %v52
  %v770 = vunpack.c.l.b16 %v53
  %v771 = vunpack.c.l.b16 %v54
  %v772 = vunpack.c.l.b16 %v55
  %v773 = vunpack.c.l.b16 %v56
  %v774 = vunpack.c.l.b16 %v57
  %v775 = vunpack.c.l.b16 %v58
  %v776 = vunpack.c.l.b16 %v59
  %v777 = vunpack.c.l.b16 %v60
  %v778 = vunpack.c.l.b16 %v61
  %v779 = vunpack.c.l.b16 %v62
  %v780 = vunpack.c.l.b16 %v63
  %v781 = vunpack.c.l.b16 %v64
  %v782 = vunpack.c.l.b16 %v65
  %v783 = vunpack.c.l.b16 %v66
  %v784 = vunpack.c.l.b16 %v67
  %v785 = vunpack.c.l.b16 %v68
  %v786 = vunpack.c.l.b16 %v69
  %v787 = vunpack.c.l.b16 %v70
  %v788 = vunpack.c.l.b16 %v71
  %v789 = vunpack.c.l.b16 %v72
  %v790 = vunpack.c.l.b16 %v73
  %v791 = vunpack.c.l.b16 %v74
  %v792 = vunpack.c.l.b16 %v75
  %v793 = vunpack.c.l.b16 %v76
  %v794 = vunpack.c.l.b16 %v77
  %v795 = vunpack.c.l.b16 %v78
  %v796 = vunpack.c.l.b16 %v79
  %v797 = vunpack.c.l.b16 %v80
  %v798 = vunpack.c.l.b16 %v81
  %v799 = vunpack.c.l.b16 %v82
  %v800 = vunpack.c.l.b16 %v83
  %v801 = vunpack.c.l.b16 %v84
  %v802 = vunpack.c.l.b16 %v85
  %v803 = vunpack.c.l.b16 %v86
  %v804 = vunpack.c.l.b16 %v87
  %v805 = vunpack.c.l.b16 %v88
  %v806 = vunpack.c.l.b16 %v89
  %v807 = vunpack.c.l.b16 %v90
  %v808 = vunpack.c.l.b16 %v91
  %v809 = vunpack.c.l.b16 %v92
  %v810 = vunpack.c.l.b16 %v93
  %v811 = vunpack.c.l.b16 %v94
  %v812 = vunpack.c.l.b16 %v95
  %v813 = vunpack.c.l.b16 %v96
  %v814 = vunpack.c.l.b16 %v97
  %v815 = vunpack.c.l.b16 %v98
  %v816 = vunpack.c.l.b16 %v99
  %v817 = vunpack.c.l.b16 %v100
  %v818 = vunpack.c.l.b16 %v101
  %v819 = vunpack.c.l.b16 %v102
  %v820 = vunpack.c.l.b16 %v103
  %v821 = vunpack.c.l.b16 %v104
  %v822 = vunpack.c.l.b16 %v105
  %v823 = vunpack.c.l.b16 %v106
  %v824 = vunpack.c.l.b16 %v107
  %v825 = vunpack.c.l.b16 %v108
  %v826 = vunpack.c.l.b16 %v109
  %v827 = vunpack.c.l.b16 %v110
  %v828 = vunpack.c.l.b16 %v111
  %v829 = vunpack.c.l.b16 %v112
  %v830 = vunpack.c.l.b16 %v113
  %v831 = vunpack.c.l.b16 %v114
  %v832 = vunpack.c.l.b16 %v115
  %v833 = vunpack.c.l.b16 %v116
  %v834 = vunpack.c.l.b16 %v117
  %v835 = vunpack.c.l.b16 %v118
  %v836 = vunpack.c.l.b16 %v119
  %v837 = vunpack.c.l.b16 %v120
  %v838 = vunpack.c.l.b16 %v121
  %v839 = vunpack.c.l.b16 %v122
  %v840 = vunpack.c.l.b16 %v123
  %v841 = vunpack.c.l.b16 %v124
  %v842 = vunpack.c.l.b16 %v125
  %v843 = vunpack.c.l.b16 %v126
  %v844 = vunpack.c.l.b16 %v127
  %v845 = vunpack.c.l.b16 %v128
  %v846 = vunpack.c.l.b16 %v129
  %v847 = vunpack.c.l.b16 %v130
  %v848 = vunpack.c.l.b16 %v131
  %v849 = vunpack.c.l.b16 %v132
  %v850 = vunpack.c.l.b16 %v133
  %v851 = vunpack.c.l.b16 %v134
  %v852 = vunpack.c.l.b16 %v135
  %v853 = vunpack.c.l.b16 %v136
  %v854 = vunpack.c.l.b16 %v137
  %v855 = vunpack.c.l.b16 %v138
  %v856 = vunpack.c.l.b16 %v139
  %v857 = vunpack.c.l.b16 %v140
  %v858 = vunpack.c.l.b16 %v141
  %v859 = vunpack.c.l.b16 %v142
  %v860 = vunpack.c.l.b16 %v143
  %v861 = vunpack.c.l.b16 %v144
  %v862 = vunpack.c.l.b16 %v145
  %v863 = vunpack.c.l.b16 %v146
  %v864 = vunpack.c.l.b16 %v147
  %v865 = vunpack.c.l.b16 %v148
  %v866 = vunpack.c.l.b16 %v149
  %v867 = vunpack.c.l.b16 %v150
  %v868 = vunpack.c.l.b16 %v151
  %v869 = vunpack.c.l.b16 %v152
  %v870 = vunpack.c.l.b16 %v153
  %v871 = vunpack.c.l.b16 %v154
  %v872 = vunpack.c.l.b16 %v155
  %v873 = vunpack.c.l.b16 %v156
  %v874 = vunpack.c.l.b16 %v157
  %v875 = vunpack.c.l.b16 %v158
  %v876 = vunpack.c.l.b16 %v159
  %v877 = vunpack.c.l.b16 %v160
  %v878 = vunpack.c.l.b16 %v161
  %v879 = vunpack.c.l.b16 %v162
  %v880 = vunpack.c.l.b16 %v163
  %v881 = vunpack.c.l.b16 %v164
  %v882 = vunpack.c.l.b16 %v165
  %v883 = vunpack.c.l.b16 %v166
  %v884 = vunpack.c.l.b16 %v167
  %v885 = vunpack.c.l.b16 %v168
  %v886 = vunpack.c.l.b16 %v169
  %v887 = vunpack.c.l.b16 %v170
  %v888 = vunpack.c.l.b16 %v171
  %v889 = vunpack.c.l.b16 %v172
  %v890 = vunpack.c.l.b16 %v173
  %v891 = vunpack.c.l.b16 %v174
  %v892 = vunpack.c.l.b16 %v175
  %v893 = vunpack.c.l.b16 %v176
  %v894 = vunpack.c.l.b16 %v177
  %v895 = vunpack.c.l.b16 %v178
  %v896 = vunpack.c.l.b16 %v179
  %v897 = vunpack.c.l.b16 %v180
  %v898 = vunpack.c.l.b16 %v181
  %v899 = vunpack.c.l.b16 %v182
  %v900 = vunpack.c.l.b16 %v183
  %v901 = vunpack.c.l.b16 %v184
  %v902 = vunpack.c.l.b16 %v185
  %v903 = vunpack.c.l.b16 %v186
  %v904 = vunpack.c.l.b16 %v187
  %v905 = vunpack.c.l.b16 %v188
  %v906 = vunpack.c.l.b16 %v189
  %v907 = vunpack.c.l.b16 %v190
  %v908 = vunpack.c.l.b16 %v191
  %v909 = vunpack.c.l.b16 %v192
  %v910 = vunpack.c.l.b16 %v193
  %v911 = vunpack.c.l.b16 %v194
  %v912 = vpack.c.b16 %v769, %v768
  %v913 = vpack.c.b16 %v771, %v770
  %v914 = vpack.c.b16 %v773, %v772
  %v915 = vpack.c.b16 %v775, %v774
  %v916 = vpack.c.b16 %v777, %v776
  %v917 = vpack.c.b16 %v779, %v778
  %v918 = vpack.c.b16 %v781, %v780
  %v919 = vpack.c.b16 %v783, %v782
  %v920 = vpack.c.b16 %v785, %v784
  %v921 = vpack.c.b16 %v787, %v786
  %v922 = vpack.c.b16 %v789, %v788
  %v923 = vpack.c.b16 %v791, %v790
  %v924 = vpack.c.b16 %v793, %v792
  %v925 = vpack.c.b16 %v795, %v794
  %v926 = vpack.c.b16 %v797, %v796
  %v927 = vpack.c.b16 %v799, %v798
  %v928 = vpack.c.b16 %v801, %v800
  %v929 = vpack.c.b16 %v803, %v802
  %v930 = vpack.c.b16 %v805, %v804
  %v931 = vpack.c.b16 %v807, %v806
  %v932 = vpack.c.b16 %v809, %v808
  %v933 = vpack.c.b16 %v811, %v810
  %v934 = vpack.c.b16 %v813, %v812
  %v935 = vpack.c.b16 %v815, %v814
  %v936 = vpack.c.b16 %v817, %v816
  %v937 = vpack.c.b16 %v819, %v818
  %v938 = vpack.c.b16 %v821, %v820
  %v939 = vpack.c.b16 %v823, %v822
  %v940 = vpack.c.b16 %v825, %v824
  %v941 = vpack.c.b16 %v827, %v826
  %v942 = vpack.c.b16 %v829, %v828
  %v943 = vpack.c.b16 %v831, %v830
  %v944 = vpack.c.b16 %v833, %v832
  %v945 = vpack.c.b16 %v835, %v834
  %v946 = vpack.c.b16 %v837, %v836
  %v947 = vpack.c.b16 %v839, %v838
  %v948 = vpack.c.b16 %v841, %v840
  %v949 = vpack.c.b16 %v843, %v842
  %v950 = vpack.c.b16 %v845, %v844
  %v951 = vpack.c.b16 %v847, %v846
  %v952 = vpack.c.b16 %v849, %v848
  %v953 = vpack.c.b16 %v851, %v850
  %v954 = vpack.c.b16 %v853, %v852
  %v955 = vpack.c.b16 %v855, %v854
  %v956 = vpack.c.b16 %v857, %v856
  %v957 = vpack.c.b16 %v859, %v858
  %v958 = vpack.c.b16 %v861, %v860
  %v959 = vpack.c.b16 %v863, %v862
  %v960 = vpack.c.b16 %v865, %v864
  %v961 = vpack.c.b16 %v867, %v866
  %v962 = vpack.c.b16 %v869, %v868
  %v963 = vpack.c.b16 %v871, %v870
  %v964 = vpack.c.b16 %v873, %v872
  %v965 = vpack.c.b16 %v875, %v874
  %v966 = vpack.c.b16 %v877, %v876
  %v967 = vpack.c.b16 %v879, %v878
  %v968 = vpack.c.b16 %v881, %v880
  %v969 = vpack.c.b16 %v883, %v882
  %v970 = vpack.c.b16 %v885, %v884
  %v971 = vpack.c.b16 %v887, %v886
  %v972 = vpack.c.b16 %v889, %v888
  %v973 = vpack.c.b16 %v891, %v890
  %v974 = vpack.c.b16 %v893, %v892
  %v975 = vpack.c.b16 %v895, %v894
  %v976 = vpack.c.b16 %v897, %v896
  %v977 = vpack.c.b16 %v899, %v898
  %v978 = vpack.c.b16 %v901, %v900
  %v979 = vpack.c.b16 %v903, %v902
  %v980 = vpack.c.b16 %v905, %v904
  %v981 = vpack.c.b16 %v907, %v906
  %v982 = vpack.c.b16 %v909, %v908
  %v983 = vpack.c.b16 %v911, %v910
  %1056 = vmatpush.bf16.msra.mxu0 %v919
  %1057 = vmatpush.bf16.msra.mxu0 %v918
  %1058 = vmatpush.bf16.msra.mxu0 %v917
  %1059 = vmatpush.bf16.msra.mxu0 %v916
  %1060 = vmatpush.bf16.msra.mxu0 %v915
  %1061 = vmatpush.bf16.msra.mxu0 %v914
  %1062 = vmatpush.bf16.msra.mxu0 %v913
  %1063 = vmatpush.bf16.msra.mxu0 %v912
  %1064 = vmatmul.bf16.gmra.mxu0 %v612
  %v1065 = vpop.f32.mrf.mxu0
  %v1066 = vadd.f32 %v622, %v1065
  %v1067 = vpop.f32.mrf.mxu0
  %v1068 = vadd.f32 %v622, %v1067
  %1069 = vdwg.mxu0
  %1070 = vmatpush.bf16.msra.mxu0 %v927
  %1071 = vmatpush.bf16.msra.mxu0 %v926
  %1072 = vmatpush.bf16.msra.mxu0 %v925
  %1073 = vmatpush.bf16.msra.mxu0 %v924
  %1074 = vmatpush.bf16.msra.mxu0 %v923
  %1075 = vmatpush.bf16.msra.mxu0 %v922
  %1076 = vmatpush.bf16.msra.mxu0 %v921
  %1077 = vmatpush.bf16.msra.mxu0 %v920
  %1078 = vmatmul.bf16.gmra.mxu0 %v613
  %v1079 = vpop.f32.mrf.mxu0
  %v1080 = vadd.f32 %v1066, %v1079
  %v1081 = vpop.f32.mrf.mxu0
  %v1082 = vadd.f32 %v1068, %v1081
  %1083 = vdwg.mxu0
  %1084 = vmatpush.bf16.msra.mxu0 %v935
  %1085 = vmatpush.bf16.msra.mxu0 %v934
  %1086 = vmatpush.bf16.msra.mxu0 %v933
  %1087 = vmatpush.bf16.msra.mxu0 %v932
  %1088 = vmatpush.bf16.msra.mxu0 %v931
  %1089 = vmatpush.bf16.msra.mxu0 %v930
  %1090 = vmatpush.bf16.msra.mxu0 %v929
  %1091 = vmatpush.bf16.msra.mxu0 %v928
  %1092 = vmatmul.bf16.gmra.mxu0 %v614
  %v1093 = vpop.f32.mrf.mxu0
  %v1094 = vadd.f32 %v1080, %v1093
  %v1095 = vpop.f32.mrf.mxu0
  %v1096 = vadd.f32 %v1082, %v1095
  %1097 = vdwg.mxu0
  %1098 = vmatpush.bf16.msra.mxu0 %v943
  %1099 = vmatpush.bf16.msra.mxu0 %v942
  %1100 = vmatpush.bf16.msra.mxu0 %v941
  %1101 = vmatpush.bf16.msra.mxu0 %v940
  %1102 = vmatpush.bf16.msra.mxu0 %v939
  %1103 = vmatpush.bf16.msra.mxu0 %v938
  %1104 = vmatpush.bf16.msra.mxu0 %v937
  %1105 = vmatpush.bf16.msra.mxu0 %v936
  %1106 = vmatmul.bf16.gmra.mxu0 %v615
  %v1107 = vpop.f32.mrf.mxu0
  %v1108 = vadd.f32 %v1094, %v1107
  %v1109 = vpop.f32.mrf.mxu0
  %v1110 = vadd.f32 %v1096, %v1109
  %1111 = vdwg.mxu0
  %1112 = vmatpush.bf16.msra.mxu0 %v951
  %1113 = vmatpush.bf16.msra.mxu0 %v950
  %1114 = vmatpush.bf16.msra.mxu0 %v949
  %1115 = vmatpush.bf16.msra.mxu0 %v948
  %1116 = vmatpush.bf16.msra.mxu0 %v947
  %1117 = vmatpush.bf16.msra.mxu0 %v946
  %1118 = vmatpush.bf16.msra.mxu0 %v945
  %1119 = vmatpush.bf16.msra.mxu0 %v944
  %1120 = vmatmul.bf16.gmra.mxu0 %v616
  %v1121 = vpop.f32.mrf.mxu0
  %v1122 = vadd.f32 %v1108, %v1121
  %v1123 = vpop.f32.mrf.mxu0
  %v1124 = vadd.f32 %v1110, %v1123
  %1125 = vdwg.mxu0
  %1126 = vmatpush.bf16.msra.mxu0 %v959
  %1127 = vmatpush.bf16.msra.mxu0 %v958
  %1128 = vmatpush.bf16.msra.mxu0 %v957
  %1129 = vmatpush.bf16.msra.mxu0 %v956
  %1130 = vmatpush.bf16.msra.mxu0 %v955
  %1131 = vmatpush.bf16.msra.mxu0 %v954
  %1132 = vmatpush.bf16.msra.mxu0 %v953
  %1133 = vmatpush.bf16.msra.mxu0 %v952
  %1134 = vmatmul.bf16.gmra.mxu0 %v617
  %v1135 = vpop.f32.mrf.mxu0
  %v1136 = vadd.f32 %v1122, %v1135
  %v1137 = vpop.f32.mrf.mxu0
  %v1138 = vadd.f32 %v1124, %v1137
  %1139 = vdwg.mxu0
  %1140 = vmatpush.bf16.msra.mxu0 %v967
  %1141 = vmatpush.bf16.msra.mxu0 %v966
  %1142 = vmatpush.bf16.msra.mxu0 %v965
  %1143 = vmatpush.bf16.msra.mxu0 %v964
  %1144 = vmatpush.bf16.msra.mxu0 %v963
  %1145 = vmatpush.bf16.msra.mxu0 %v962
  %1146 = vmatpush.bf16.msra.mxu0 %v961
  %1147 = vmatpush.bf16.msra.mxu0 %v960
  %1148 = vmatmul.bf16.gmra.mxu0 %v618
  %v1149 = vpop.f32.mrf.mxu0
  %v1150 = vadd.f32 %v1136, %v1149
  %v1151 = vpop.f32.mrf.mxu0
  %v1152 = vadd.f32 %v1138, %v1151
  %1153 = vdwg.mxu0
  %1154 = vmatpush.bf16.msra.mxu0 %v975
  %1155 = vmatpush.bf16.msra.mxu0 %v974
  %1156 = vmatpush.bf16.msra.mxu0 %v973
  %1157 = vmatpush.bf16.msra.mxu0 %v972
  %1158 = vmatpush.bf16.msra.mxu0 %v971
  %1159 = vmatpush.bf16.msra.mxu0 %v970
  %1160 = vmatpush.bf16.msra.mxu0 %v969
  %1161 = vmatpush.bf16.msra.mxu0 %v968
  %1162 = vmatmul.bf16.gmra.mxu0 %v619
  %v1163 = vpop.f32.mrf.mxu0
  %v1164 = vadd.f32 %v1150, %v1163
  %v1165 = vpop.f32.mrf.mxu0
  %v1166 = vadd.f32 %v1152, %v1165
  %1167 = vdwg.mxu0
  %1168 = vmatpush.bf16.msra.mxu0 %v983
  %1169 = vmatpush.bf16.msra.mxu0 %v982
  %1170 = vmatpush.bf16.msra.mxu0 %v981
  %1171 = vmatpush.bf16.msra.mxu0 %v980
  %1172 = vmatpush.bf16.msra.mxu0 %v979
  %1173 = vmatpush.bf16.msra.mxu0 %v978
  %1174 = vmatpush.bf16.msra.mxu0 %v977
  %1175 = vmatpush.bf16.msra.mxu0 %v976
  %1176 = vmatmul.bf16.gmra.mxu0 %v620
  %v1177 = vpop.f32.mrf.mxu0
  %v1178 = vadd.f32 %v1164, %v1177
  %v1179 = vpop.f32.mrf.mxu0
  %v1180 = vadd.f32 %v1166, %v1179
  %1181 = vdwg.mxu0
  %v1182 = vpack.c.bf16 %v1178, %v1178
  %v1183 = vpack.c.bf16 %v1180, %v1180
  %1184 = vst [vmem:[%s7] sm:$0xf] %v1182
  %vm1185 = vcmask 1040384
  %vm1186 = vsmask.f32 256
  %vm1187 = vmand %vm1185, %vm1186
  %v1188 = vld [vmem:[%s7 + $0x4] sm:$0x1]
  %v1189 = vsel %vm1187, %v1183, %v1188
  %1190 = vst [vmem:[%s7 + $0x4] sm:$0x1] %v1189
  %s1191 = scalar_lea.vmem %s0, 56
  %v1192 = vld [vmem:[%s1191] sm:$0xff]
  %v1193 = vld [vmem:[%s1191 + $0x8] sm:$0xff]
  %v1194 = vld [vmem:[%s1191 + $0x10] sm:$0xff]
  %v1195 = vld [vmem:[%s1191 + $0x18] sm:$0xff]
  %v1196 = vld [vmem:[%s1191 + $0x20] sm:$0xff]
  %v1197 = vld [vmem:[%s1191 + $0x28] sm:$0xff]
  %v1198 = vld [vmem:[%s1191 + $0x30] sm:$0x11]
  %v1206 = vunpack.c.l.b16 %v1192
  %v1207 = vunpack.c.h.b16 %v1192
  %v1208 = vunpack.c.l.b16 %v1193
  %v1209 = vunpack.c.h.b16 %v1193
  %v1210 = vunpack.c.l.b16 %v1194
  %v1211 = vunpack.c.h.b16 %v1194
  %v1212 = vunpack.c.l.b16 %v1195
  %v1213 = vunpack.c.h.b16 %v1195
  %v1214 = vunpack.c.l.b16 %v1196
  %v1215 = vunpack.c.h.b16 %v1196
  %v1216 = vunpack.c.l.b16 %v1197
  %v1217 = vunpack.c.h.b16 %v1197
  %v1218 = vunpack.c.l.b16 %v1198
  %v1219 = vunpack.c.h.b16 %v1198
  %v1220 = vpack.c.b16 %v1208, %v1206
  %v1221 = vpack.c.b16 %v1209, %v1207
  %v1222 = vpack.c.b16 %v1212, %v1210
  %v1223 = vpack.c.b16 %v1213, %v1211
  %v1224 = vpack.c.b16 %v1216, %v1214
  %v1225 = vpack.c.b16 %v1217, %v1215
  %v1226 = vpack.c.b16 %v1218, %v1218
  %v1227 = vpack.c.b16 %v1219, %v1219
  %v1233 = vsel %vm312, %v1221, 0
  %v1236 = vsel %vm312, %v1223, 0
  %v1239 = vsel %vm312, %v1225, 0
  %v1242 = vsel %vm312, %v1227, 0
  %1244 = vmatpush.bf16.msra.mxu0 %v295
  %1245 = vmatpush.bf16.msra.mxu0 %v294
  %1246 = vmatpush.bf16.msra.mxu0 %v293
  %1247 = vmatpush.bf16.msra.mxu0 %v292
  %1248 = vmatpush.bf16.msra.mxu0 %v291
  %1249 = vmatpush.bf16.msra.mxu0 %v290
  %1250 = vmatpush.bf16.msra.mxu0 %v289
  %1251 = vmatpush.bf16.msra.mxu0 %v288
  %1252 = vmatmul.bf16.gmra.mxu0 %v1220
  %v1253 = vpop.f32.mrf.mxu0
  %v1254 = vadd.f32 %v205, %v1253
  %v1255 = vpop.f32.mrf.mxu0
  %v1256 = vadd.f32 %v205, %v1255
  %1257 = vmatmul.bf16.gmra.mxu0 %v1222
  %v1258 = vpop.f32.mrf.mxu0
  %v1259 = vadd.f32 %v205, %v1258
  %v1260 = vpop.f32.mrf.mxu0
  %v1261 = vadd.f32 %v205, %v1260
  %1262 = vmatmul.bf16.gmra.mxu0 %v1224
  %v1263 = vpop.f32.mrf.mxu0
  %v1264 = vadd.f32 %v205, %v1263
  %v1265 = vpop.f32.mrf.mxu0
  %v1266 = vadd.f32 %v205, %v1265
  %1267 = vmatmul.bf16.gmra.mxu0 %v1226
  %v1268 = vpop.f32.mrf.mxu0
  %v1269 = vadd.f32 %v205, %v1268
  %v1270 = vpop.f32.mrf.mxu0
  %1271 = vdwg.mxu0
  %1272 = vmatpush.bf16.msra.mxu0 0
  %1273 = vmatpush.bf16.msra.mxu0 0
  %1274 = vmatpush.bf16.msra.mxu0 0
  %1275 = vmatpush.bf16.msra.mxu0 0
  %1276 = vmatpush.bf16.msra.mxu0 %v299
  %1277 = vmatpush.bf16.msra.mxu0 %v298
  %1278 = vmatpush.bf16.msra.mxu0 %v297
  %1279 = vmatpush.bf16.msra.mxu0 %v296
  %1280 = vmatmul.bf16.gmra.mxu0 %v1233
  %v1281 = vpop.f32.mrf.mxu0
  %v1282 = vadd.f32 %v1254, %v1281
  %v1283 = vpop.f32.mrf.mxu0
  %v1284 = vadd.f32 %v1256, %v1283
  %1285 = vmatmul.bf16.gmra.mxu0 %v1236
  %v1286 = vpop.f32.mrf.mxu0
  %v1287 = vadd.f32 %v1259, %v1286
  %v1288 = vpop.f32.mrf.mxu0
  %v1289 = vadd.f32 %v1261, %v1288
  %1290 = vmatmul.bf16.gmra.mxu0 %v1239
  %v1291 = vpop.f32.mrf.mxu0
  %v1292 = vadd.f32 %v1264, %v1291
  %v1293 = vpop.f32.mrf.mxu0
  %v1294 = vadd.f32 %v1266, %v1293
  %1295 = vmatmul.bf16.gmra.mxu0 %v1242
  %v1296 = vpop.f32.mrf.mxu0
  %v1297 = vadd.f32 %v1269, %v1296
  %v1298 = vpop.f32.mrf.mxu0
  %1299 = vdwg.mxu0
  %v1300 = vadd.f32 %v1282, %v1284
  %v1301 = vadd.f32 %v1300, %v1287
  %v1302 = vadd.f32 %v1301, %v1289
  %v1303 = vadd.f32 %v1302, %v1292
  %v1304 = vadd.f32 %v1303, %v1294
  %v1305 = vsel %vm386, %v1297, 0.0
  %v1306 = vadd.f32 %v1304, %v1305
  %v1307 = vrot.slane %v1306, 4
  %v1308 = vadd.f32 %v1306, %v1307
  %v1309 = vrot.slane %v1308, 2
  %v1310 = vadd.f32 %v1308, %v1309
  %v1311 = vrot.slane %v1310, 1
  %v1312 = vadd.f32 %v1310, %v1311
  %v1313 = vmul.f32 %v1312, %v401
  %v1314 = vmul.f32 %v1282, %v1282
  %v1315 = vmul.f32 %v1284, %v1284
  %v1316 = vmul.f32 %v1287, %v1287
  %v1317 = vmul.f32 %v1289, %v1289
  %v1318 = vmul.f32 %v1292, %v1292
  %v1319 = vmul.f32 %v1294, %v1294
  %v1320 = vmul.f32 %v1297, %v1297
  %v1321 = vadd.f32 %v1314, %v1315
  %v1322 = vadd.f32 %v1321, %v1316
  %v1323 = vadd.f32 %v1322, %v1317
  %v1324 = vadd.f32 %v1323, %v1318
  %v1325 = vadd.f32 %v1324, %v1319
  %v1326 = vsel %vm386, %v1320, 0.0
  %v1327 = vadd.f32 %v1325, %v1326
  %v1328 = vrot.slane %v1327, 4
  %v1329 = vadd.f32 %v1327, %v1328
  %v1330 = vrot.slane %v1329, 2
  %v1331 = vadd.f32 %v1329, %v1330
  %v1332 = vrot.slane %v1331, 1
  %v1333 = vadd.f32 %v1331, %v1332
  %v1334 = vmul.f32 %v1333, %v401
  %v1335 = vmul.f32 %v1313, %v1313
  %v1336 = vsub.f32 %v1334, %v1335
  %v1337 = vmax.f32 %v1336, 0.0
  %v1338 = vld [vmem:[%s3] sm:$0x1]
  %v1339 = vadd.f32 %v1337, 1e-05
  %v1340 = vrsqrt.pop %v1339
  %v1341 = vmul.f32 %v1340, %v1339
  %v1342 = vmul.f32 %v1341, %v1340
  %v1343 = vmul.f32 0.5, %v1342
  %v1344 = vsub.f32 1.5, %v1343
  %v1345 = vmul.f32 %v1340, %v1344
  %vm1346 = vweird.f32 %v1339
  %vm1347 = vweird.f32 %v1340
  %vm1348 = vmor %vm1346, %vm1347
  %v1349 = vsel %vm1348, %v1340, %v1345
  %v1350 = vmul.f32 %v1338, %v1349
  %v1351 = vld [vmem:[%s4] sm:$0x1]
  %v1352 = vmul.f32 %v1313, %v1350
  %v1353 = vsub.f32 %v1351, %v1352
  %v1355 = vperm.slane %v1350, 0
  %v1357 = vmul.f32 %v1282, %v1355
  %v1358 = vmul.f32 %v1284, %v1355
  %v1359 = vmul.f32 %v1287, %v1355
  %v1360 = vmul.f32 %v1289, %v1355
  %v1361 = vmul.f32 %v1292, %v1355
  %v1362 = vmul.f32 %v1294, %v1355
  %v1363 = vmul.f32 %v1297, %v1355
  %v1365 = vperm.slane %v1353, 0
  %v1367 = vadd.f32 %v1357, %v1365
  %v1368 = vadd.f32 %v1358, %v1365
  %v1369 = vadd.f32 %v1359, %v1365
  %v1370 = vadd.f32 %v1360, %v1365
  %v1371 = vadd.f32 %v1361, %v1365
  %v1372 = vadd.f32 %v1362, %v1365
  %v1373 = vadd.f32 %v1363, %v1365
  %v1374 = vmax.f32 %v1367, 0.0
  %v1375 = vmax.f32 %v1368, 0.0
  %v1376 = vmax.f32 %v1369, 0.0
  %v1377 = vmax.f32 %v1370, 0.0
  %v1378 = vmax.f32 %v1371, 0.0
  %v1379 = vmax.f32 %v1372, 0.0
  %v1380 = vmax.f32 %v1373, 0.0
  %1381 = vst [vmem:[#allocation2] sm:$0xff] %v1374
  %1382 = vst [vmem:[#allocation2 + $0x8] sm:$0xff] %v1375
  %1383 = vst [vmem:[#allocation2 + $0x10] sm:$0xff] %v1376
  %1384 = vst [vmem:[#allocation2 + $0x18] sm:$0xff] %v1377
  %1385 = vst [vmem:[#allocation2 + $0x20] sm:$0xff] %v1378
  %1386 = vst [vmem:[#allocation2 + $0x28] sm:$0xff] %v1379
  %1387 = vst [vmem:[#allocation2 + $0x30] sm:$0x1] %v1380
  %v1388 = vld [vmem:[#allocation2] sm:$0x7]
  %v1389 = vld [vmem:[#allocation2 + $0x4] sm:$0x7]
  %v1390 = vld [vmem:[#allocation2 + $0x1] sm:$0x7]
  %v1391 = vld [vmem:[#allocation2 + $0x7] sm:$0x7]
  %v1392 = vld [vmem:[#allocation2 + $0xb] sm:$0x7]
  %v1393 = vld [vmem:[#allocation2 + $0x8] sm:$0x7]
  %v1394 = vld [vmem:[#allocation2 + $0xe] sm:$0x7]
  %v1395 = vld [vmem:[#allocation2 + $0x12] sm:$0x7]
  %v1396 = vld [vmem:[#allocation2 + $0xf] sm:$0x7]
  %1397 = vst [vmem:[#allocation3] sm:$0x7] %v1388
  %1398 = vst [vmem:[#allocation3 + $0x8] sm:$0x7] %v1389
  %1399 = vst [vmem:[#allocation3 + $0x10] sm:$0x7] %v1390
  %1400 = vst [vmem:[#allocation3 + $0x18] sm:$0x7] %v1391
  %1401 = vst [vmem:[#allocation3 + $0x20] sm:$0x7] %v1392
  %1402 = vst [vmem:[#allocation3 + $0x28] sm:$0x7] %v1393
  %1403 = vst [vmem:[#allocation3 + $0x30] sm:$0x7] %v1394
  %1404 = vst [vmem:[#allocation3 + $0x38] sm:$0x7] %v1395
  %1405 = vst [vmem:[#allocation3 + $0x40] sm:$0x7] %v1396
  %v1406 = vld [vmem:[#allocation2 + $0xe] sm:$0x7]
  %v1407 = vld [vmem:[#allocation2 + $0x12] sm:$0x7]
  %v1408 = vld [vmem:[#allocation2 + $0xf] sm:$0x7]
  %v1409 = vld [vmem:[#allocation2 + $0x15] sm:$0x7]
  %v1410 = vld [vmem:[#allocation2 + $0x19] sm:$0x7]
  %v1411 = vld [vmem:[#allocation2 + $0x16] sm:$0x7]
  %v1412 = vld [vmem:[#allocation2 + $0x1c] sm:$0x7]
  %v1413 = vld [vmem:[#allocation2 + $0x20] sm:$0x7]
  %v1414 = vld [vmem:[#allocation2 + $0x1d] sm:$0x7]
  %v1424 = vrot.slane %v1406, 5
  %v1425 = vrot.slane %v1407, 5
  %v1426 = vrot.slane %v1408, 5
  %v1427 = vrot.slane %v1409, 5
  %v1428 = vrot.slane %v1410, 5
  %v1429 = vrot.slane %v1411, 5
  %v1430 = vrot.slane %v1412, 5
  %v1431 = vrot.slane %v1413, 5
  %v1432 = vrot.slane %v1414, 5
  %1442 = vst [vmem:[#allocation3] sm:$0x38] %v1424
  %1443 = vst [vmem:[#allocation3 + $0x8] sm:$0x38] %v1425
  %1444 = vst [vmem:[#allocation3 + $0x10] sm:$0x38] %v1426
  %1445 = vst [vmem:[#allocation3 + $0x18] sm:$0x38] %v1427
  %1446 = vst [vmem:[#allocation3 + $0x20] sm:$0x38] %v1428
  %1447 = vst [vmem:[#allocation3 + $0x28] sm:$0x38] %v1429
  %1448 = vst [vmem:[#allocation3 + $0x30] sm:$0x38] %v1430
  %1449 = vst [vmem:[#allocation3 + $0x38] sm:$0x38] %v1431
  %1450 = vst [vmem:[#allocation3 + $0x40] sm:$0x38] %v1432
  %v1451 = vld [vmem:[#allocation2 + $0x1c] sm:$0x7]
  %v1452 = vld [vmem:[#allocation2 + $0x20] sm:$0x7]
  %v1453 = vld [vmem:[#allocation2 + $0x1d] sm:$0x7]
  %v1454 = vld [vmem:[#allocation2 + $0x23] sm:$0x7]
  %v1455 = vld [vmem:[#allocation2 + $0x27] sm:$0x7]
  %v1456 = vld [vmem:[#allocation2 + $0x24] sm:$0x7]
  %v1457 = vld [vmem:[#allocation2 + $0x2a] sm:$0x7]
  %v1458 = vld [vmem:[#allocation2 + $0x2e] sm:$0x7]
  %v1459 = vld [vmem:[#allocation2 + $0x2b] sm:$0x7]
  %v1469 = vrot.slane %v1451, 2
  %v1470 = vrot.slane %v1452, 2
  %v1471 = vrot.slane %v1453, 2
  %v1472 = vrot.slane %v1454, 2
  %v1473 = vrot.slane %v1455, 2
  %v1474 = vrot.slane %v1456, 2
  %v1475 = vrot.slane %v1457, 2
  %v1476 = vrot.slane %v1458, 2
  %v1477 = vrot.slane %v1459, 2
  %1487 = vst [vmem:[#allocation3] sm:$0xc0] %v1469
  %1488 = vst [vmem:[#allocation3 + $0x8] sm:$0xc0] %v1470
  %1489 = vst [vmem:[#allocation3 + $0x10] sm:$0xc0] %v1471
  %1490 = vst [vmem:[#allocation3 + $0x18] sm:$0xc0] %v1472
  %1491 = vst [vmem:[#allocation3 + $0x20] sm:$0xc0] %v1473
  %1492 = vst [vmem:[#allocation3 + $0x28] sm:$0xc0] %v1474
  %1493 = vst [vmem:[#allocation3 + $0x30] sm:$0xc0] %v1475
  %1494 = vst [vmem:[#allocation3 + $0x38] sm:$0xc0] %v1476
  %1495 = vst [vmem:[#allocation3 + $0x40] sm:$0xc0] %v1477
  %1496 = vst [vmem:[#allocation3 + $0x48] sm:$0x1] %v1469
  %1497 = vst [vmem:[#allocation3 + $0x50] sm:$0x1] %v1470
  %1498 = vst [vmem:[#allocation3 + $0x58] sm:$0x1] %v1471
  %1499 = vst [vmem:[#allocation3 + $0x60] sm:$0x1] %v1472
  %1500 = vst [vmem:[#allocation3 + $0x68] sm:$0x1] %v1473
  %1501 = vst [vmem:[#allocation3 + $0x70] sm:$0x1] %v1474
  %1502 = vst [vmem:[#allocation3 + $0x78] sm:$0x1] %v1475
  %1503 = vst [vmem:[#allocation3 + $0x80] sm:$0x1] %v1476
  %1504 = vst [vmem:[#allocation3 + $0x88] sm:$0x1] %v1477
  %v1505 = vld [vmem:[#allocation3] sm:$0xff]
  %v1506 = vld [vmem:[#allocation3 + $0x8] sm:$0xff]
  %v1507 = vld [vmem:[#allocation3 + $0x10] sm:$0xff]
  %v1508 = vld [vmem:[#allocation3 + $0x18] sm:$0xff]
  %v1509 = vld [vmem:[#allocation3 + $0x20] sm:$0xff]
  %v1510 = vld [vmem:[#allocation3 + $0x28] sm:$0xff]
  %v1511 = vld [vmem:[#allocation3 + $0x30] sm:$0xff]
  %v1512 = vld [vmem:[#allocation3 + $0x38] sm:$0xff]
  %v1513 = vld [vmem:[#allocation3 + $0x40] sm:$0xff]
  %v1514 = vld [vmem:[#allocation3 + $0x48] sm:$0x1]
  %v1515 = vld [vmem:[#allocation3 + $0x50] sm:$0x1]
  %v1516 = vld [vmem:[#allocation3 + $0x58] sm:$0x1]
  %v1517 = vld [vmem:[#allocation3 + $0x60] sm:$0x1]
  %v1518 = vld [vmem:[#allocation3 + $0x68] sm:$0x1]
  %v1519 = vld [vmem:[#allocation3 + $0x70] sm:$0x1]
  %v1520 = vld [vmem:[#allocation3 + $0x78] sm:$0x1]
  %v1521 = vld [vmem:[#allocation3 + $0x80] sm:$0x1]
  %v1522 = vld [vmem:[#allocation3 + $0x88] sm:$0x1]
  %v1523 = vpack.c.bf16 %v1514, %v1505
  %v1524 = vpack.c.bf16 %v1515, %v1506
  %v1525 = vpack.c.bf16 %v1516, %v1507
  %v1526 = vpack.c.bf16 %v1517, %v1508
  %v1527 = vpack.c.bf16 %v1518, %v1509
  %v1528 = vpack.c.bf16 %v1519, %v1510
  %v1529 = vpack.c.bf16 %v1520, %v1511
  %v1530 = vpack.c.bf16 %v1521, %v1512
  %v1531 = vpack.c.bf16 %v1522, %v1513
  %1532 = vmatpush.bf16.msra.mxu0 %v919
  %1533 = vmatpush.bf16.msra.mxu0 %v918
  %1534 = vmatpush.bf16.msra.mxu0 %v917
  %1535 = vmatpush.bf16.msra.mxu0 %v916
  %1536 = vmatpush.bf16.msra.mxu0 %v915
  %1537 = vmatpush.bf16.msra.mxu0 %v914
  %1538 = vmatpush.bf16.msra.mxu0 %v913
  %1539 = vmatpush.bf16.msra.mxu0 %v912
  %1540 = vmatmul.bf16.gmra.mxu0 %v1523
  %v1541 = vpop.f32.mrf.mxu0
  %v1542 = vadd.f32 %v622, %v1541
  %v1543 = vpop.f32.mrf.mxu0
  %v1544 = vadd.f32 %v622, %v1543
  %1545 = vdwg.mxu0
  %1546 = vmatpush.bf16.msra.mxu0 %v927
  %1547 = vmatpush.bf16.msra.mxu0 %v926
  %1548 = vmatpush.bf16.msra.mxu0 %v925
  %1549 = vmatpush.bf16.msra.mxu0 %v924
  %1550 = vmatpush.bf16.msra.mxu0 %v923
  %1551 = vmatpush.bf16.msra.mxu0 %v922
  %1552 = vmatpush.bf16.msra.mxu0 %v921
  %1553 = vmatpush.bf16.msra.mxu0 %v920
  %1554 = vmatmul.bf16.gmra.mxu0 %v1524
  %v1555 = vpop.f32.mrf.mxu0
  %v1556 = vadd.f32 %v1542, %v1555
  %v1557 = vpop.f32.mrf.mxu0
  %v1558 = vadd.f32 %v1544, %v1557
  %1559 = vdwg.mxu0
  %1560 = vmatpush.bf16.msra.mxu0 %v935
  %1561 = vmatpush.bf16.msra.mxu0 %v934
  %1562 = vmatpush.bf16.msra.mxu0 %v933
  %1563 = vmatpush.bf16.msra.mxu0 %v932
  %1564 = vmatpush.bf16.msra.mxu0 %v931
  %1565 = vmatpush.bf16.msra.mxu0 %v930
  %1566 = vmatpush.bf16.msra.mxu0 %v929
  %1567 = vmatpush.bf16.msra.mxu0 %v928
  %1568 = vmatmul.bf16.gmra.mxu0 %v1525
  %v1569 = vpop.f32.mrf.mxu0
  %v1570 = vadd.f32 %v1556, %v1569
  %v1571 = vpop.f32.mrf.mxu0
  %v1572 = vadd.f32 %v1558, %v1571
  %1573 = vdwg.mxu0
  %1574 = vmatpush.bf16.msra.mxu0 %v943
  %1575 = vmatpush.bf16.msra.mxu0 %v942
  %1576 = vmatpush.bf16.msra.mxu0 %v941
  %1577 = vmatpush.bf16.msra.mxu0 %v940
  %1578 = vmatpush.bf16.msra.mxu0 %v939
  %1579 = vmatpush.bf16.msra.mxu0 %v938
  %1580 = vmatpush.bf16.msra.mxu0 %v937
  %1581 = vmatpush.bf16.msra.mxu0 %v936
  %1582 = vmatmul.bf16.gmra.mxu0 %v1526
  %v1583 = vpop.f32.mrf.mxu0
  %v1584 = vadd.f32 %v1570, %v1583
  %v1585 = vpop.f32.mrf.mxu0
  %v1586 = vadd.f32 %v1572, %v1585
  %1587 = vdwg.mxu0
  %1588 = vmatpush.bf16.msra.mxu0 %v951
  %1589 = vmatpush.bf16.msra.mxu0 %v950
  %1590 = vmatpush.bf16.msra.mxu0 %v949
  %1591 = vmatpush.bf16.msra.mxu0 %v948
  %1592 = vmatpush.bf16.msra.mxu0 %v947
  %1593 = vmatpush.bf16.msra.mxu0 %v946
  %1594 = vmatpush.bf16.msra.mxu0 %v945
  %1595 = vmatpush.bf16.msra.mxu0 %v944
  %1596 = vmatmul.bf16.gmra.mxu0 %v1527
  %v1597 = vpop.f32.mrf.mxu0
  %v1598 = vadd.f32 %v1584, %v1597
  %v1599 = vpop.f32.mrf.mxu0
  %v1600 = vadd.f32 %v1586, %v1599
  %1601 = vdwg.mxu0
  %1602 = vmatpush.bf16.msra.mxu0 %v959
  %1603 = vmatpush.bf16.msra.mxu0 %v958
  %1604 = vmatpush.bf16.msra.mxu0 %v957
  %1605 = vmatpush.bf16.msra.mxu0 %v956
  %1606 = vmatpush.bf16.msra.mxu0 %v955
  %1607 = vmatpush.bf16.msra.mxu0 %v954
  %1608 = vmatpush.bf16.msra.mxu0 %v953
  %1609 = vmatpush.bf16.msra.mxu0 %v952
  %1610 = vmatmul.bf16.gmra.mxu0 %v1528
  %v1611 = vpop.f32.mrf.mxu0
  %v1612 = vadd.f32 %v1598, %v1611
  %v1613 = vpop.f32.mrf.mxu0
  %v1614 = vadd.f32 %v1600, %v1613
  %1615 = vdwg.mxu0
  %1616 = vmatpush.bf16.msra.mxu0 %v967
  %1617 = vmatpush.bf16.msra.mxu0 %v966
  %1618 = vmatpush.bf16.msra.mxu0 %v965
  %1619 = vmatpush.bf16.msra.mxu0 %v964
  %1620 = vmatpush.bf16.msra.mxu0 %v963
  %1621 = vmatpush.bf16.msra.mxu0 %v962
  %1622 = vmatpush.bf16.msra.mxu0 %v961
  %1623 = vmatpush.bf16.msra.mxu0 %v960
  %1624 = vmatmul.bf16.gmra.mxu0 %v1529
  %v1625 = vpop.f32.mrf.mxu0
  %v1626 = vadd.f32 %v1612, %v1625
  %v1627 = vpop.f32.mrf.mxu0
  %v1628 = vadd.f32 %v1614, %v1627
  %1629 = vdwg.mxu0
  %1630 = vmatpush.bf16.msra.mxu0 %v975
  %1631 = vmatpush.bf16.msra.mxu0 %v974
  %1632 = vmatpush.bf16.msra.mxu0 %v973
  %1633 = vmatpush.bf16.msra.mxu0 %v972
  %1634 = vmatpush.bf16.msra.mxu0 %v971
  %1635 = vmatpush.bf16.msra.mxu0 %v970
  %1636 = vmatpush.bf16.msra.mxu0 %v969
  %1637 = vmatpush.bf16.msra.mxu0 %v968
  %1638 = vmatmul.bf16.gmra.mxu0 %v1530
  %v1639 = vpop.f32.mrf.mxu0
  %v1640 = vadd.f32 %v1626, %v1639
  %v1641 = vpop.f32.mrf.mxu0
  %v1642 = vadd.f32 %v1628, %v1641
  %1643 = vdwg.mxu0
  %1644 = vmatpush.bf16.msra.mxu0 %v983
  %1645 = vmatpush.bf16.msra.mxu0 %v982
  %1646 = vmatpush.bf16.msra.mxu0 %v981
  %1647 = vmatpush.bf16.msra.mxu0 %v980
  %1648 = vmatpush.bf16.msra.mxu0 %v979
  %1649 = vmatpush.bf16.msra.mxu0 %v978
  %1650 = vmatpush.bf16.msra.mxu0 %v977
  %1651 = vmatpush.bf16.msra.mxu0 %v976
  %1652 = vmatmul.bf16.gmra.mxu0 %v1531
  %v1653 = vpop.f32.mrf.mxu0
  %v1654 = vadd.f32 %v1640, %v1653
  %v1655 = vpop.f32.mrf.mxu0
  %v1656 = vadd.f32 %v1642, %v1655
  %1657 = vdwg.mxu0
  %v1658 = vpack.c.bf16 %v1654, %v1654
  %v1659 = vpack.c.bf16 %v1656, %v1656
  %s1660 = scalar_lea.vmem %s7, 8
  %1661 = vst [vmem:[%s1660] sm:$0xf] %v1658
  %v1662 = vld [vmem:[%s1660 + $0x4] sm:$0x1]
  %v1663 = vsel %vm1187, %v1659, %v1662
  %1664 = vst [vmem:[%s1660 + $0x4] sm:$0x1] %v1663
  // Predicated region
  $region30: #{patch_embed2.1} parent=0 // pred_check
    _
  $region31: #{patch_embed2.1} parent=0 // pred_check_branch
    %1666 = sbr.rel (0) target = $region33
  $region32: #{patch_embed2.1} parent=0 // pred_region
    _
  $region33: #{patch_embed2.1} parent=0 // pred_fallthru
    _
  // Predicated region
  $region34: #{patch_embed2.1} parent=0 // pred_check
    _
  $region35: #{patch_embed2.1} parent=0 // pred_check_branch
    %1668 = sbr.rel (0) target = $region37
  $region36: #{patch_embed2.1} parent=0 // pred_region
    _
  $region37: #{patch_embed2.1} parent=0 // pred_fallthru
    _

</llo_original>
